<compile_context>
chip_gen: v7x
topology: tpu7x:2x2x1
jax: 0.10.0
libtpu: 0.0.40
codegen_flags: <defaults>
</compile_context>

<pallas_src>
import jax
import jax.numpy as jnp
from jax.experimental import pallas as pl
from jax.experimental.pallas import tpu as pltpu

LANE = 128   # TPU lane width; feature dims and node count are padded to this


def _round_up(n, m):
    return (n + m - 1) // m * m


def _fused_sage_kernel(x_ref, a_ref, w_ref, b_ref, o_ref):
    """Three fused SAGE layers; adjacency, weights and activations stay in VMEM."""
    a = a_ref[...]                       # (Np, Np) bf16 edge counts
    x = x_ref[...]                       # (Np, LANE) f32

    def sage(x_f32, layer):
        base = layer * 3 * LANE
        wp = w_ref[pl.ds(base, LANE), :]               # (128, 128) bf16  projection
        wlr = w_ref[pl.ds(base + LANE, 2 * LANE), :]   # (256, 128) bf16  [Wl; Wr]
        bp = b_ref[pl.ds(2 * layer, 1), :]             # (1, 128) f32
        bl = b_ref[pl.ds(2 * layer + 1, 1), :]         # (1, 128) f32

        xb = x_f32.astype(jnp.bfloat16)
        # projection: h = relu(x @ Wp + bp)
        h = jnp.dot(xb, wp, preferred_element_type=jnp.float32) + bp
        h = jnp.maximum(h, 0.0)
        # aggregation (aggr='add'): bf16 x bf16 MXU matmul, f32 accumulate
        agg = jnp.dot(a, h.astype(jnp.bfloat16),
                      preferred_element_type=jnp.float32)
        # fused output matmul: one K=256 dot instead of agg@Wl + x@Wr
        cat = jnp.concatenate([agg.astype(jnp.bfloat16), xb], axis=-1)
        return jnp.dot(cat, wlr, preferred_element_type=jnp.float32) + bl

    x = jnp.maximum(sage(x, 0), 0.0)     # conv1 + relu
    x = jnp.maximum(sage(x, 1), 0.0)     # conv2 + relu
    x = jax.nn.sigmoid(sage(x, 2))       # conv3 + sigmoid
    o_ref[...] = x.astype(o_ref.dtype)   # lane-dense bf16 store


def _pad2(a, rows, cols):
    return jnp.pad(a, ((0, rows - a.shape[0]), (0, cols - a.shape[1])))


def _pack_params(params):
    """Pack the 15 zero-padded weight/bias tensors into 2 contiguous slabs."""
    w_rows, b_rows = [], []
    for name in ("conv1", "conv2", "conv3"):
        p = params[name]
        w_rows += [_pad2(p["wp"], LANE, LANE),     # rows [0,128):   Wp
                   _pad2(p["wl"], LANE, LANE),     # rows [128,256): Wl
                   _pad2(p["wr"], LANE, LANE)]     # rows [256,384): Wr
        b_rows += [_pad2(p["bp"], 1, LANE), _pad2(p["bl"], 1, LANE)]
    w_slab = jnp.concatenate(w_rows, axis=0).astype(jnp.bfloat16)   # (1152, 128)
    b_rows += [jnp.zeros((1, LANE), jnp.float32)] * 2               # pad to 8 rows
    b_slab = jnp.concatenate(b_rows, axis=0)                        # (8, 128) f32
    return w_slab, b_slab


def _vmem_cap_bytes():
    # Per-generation VMEM capacity (64 MiB/TC on v7x, 128 MiB on v5e/v6e).
    try:
        return int(pltpu.get_tpu_info().vmem_capacity_bytes)
    except Exception:
        return 64 << 20


def fused_sage_forward(x, edge_index, params):
    """All three SAGEConv layers + activations in one Pallas call."""
    n = x.shape[0]
    c_out = params["conv3"]["wl"].shape[1]
    n_pad = max(_round_up(n, LANE), LANE)

    # Dense count adjacency A[i, j] = #edges j -> i, built directly in bf16 at
    # the padded size (exact while per-pair multiplicity <= 256).  Padded rows
    # AND columns stay zero, which keeps real-row results exact.
    # TODO(synk): for large/sparse graphs use a CSR gather path
    # (PrefetchScalarGridSpec + manual DMA) instead of a dense N^2 adjacency.
    src, dst = edge_index[0], edge_index[1]
    ones = jnp.ones(src.shape, jnp.bfloat16)
    a_pad = jnp.zeros((n_pad, n_pad), jnp.bfloat16).at[dst, src].add(ones)

    x_pad = _pad2(x.astype(jnp.float32), n_pad, LANE)
    w_slab, b_slab = _pack_params(params)
    flat = [x_pad, a_pad, w_slab, b_slab]

    def full(shape):
        nd = len(shape)
        return pl.BlockSpec(shape, lambda i, _nd=nd: (0,) * _nd)

    footprint = sum(int(a.size) * a.dtype.itemsize for a in flat)
    footprint += n_pad * LANE * 2                     # bf16 output block
    vmem_limit = int(min(max(4 * footprint, 32 << 20),
                         int(_vmem_cap_bytes() * 0.85)))

    # TODO(synk): for large N, row-tile A over a 'parallel' grid axis with the
    # layer axis outermost ('arbitrary') and persistent activation scratch, to
    # stream the O(N^2) adjacency and use both TensorCores on v7x.
    # TODO(synk): on v7x an fp8(e4m3) adjacency would halve A's bytes again.
    out_pad = pl.pallas_call(
        _fused_sage_kernel,
        grid=(1,),
        in_specs=[full(a.shape) for a in flat],
        out_specs=full((n_pad, LANE)),
        out_shape=jax.ShapeDtypeStruct((n_pad, LANE), jnp.bfloat16),
        compiler_params=pltpu.CompilerParams(
            dimension_semantics=("arbitrary",),
            vmem_limit_bytes=vmem_limit),
    )(*flat)

    # Slice the real rows / columns (padded sigmoid columns read 0.5),
    # then cast back to f32.
    return out_pad[:n, :c_out].astype(jnp.float32)


def my_model(x, edge_index, params):
    return fused_sage_forward(x, edge_index, params)


def make_sage_params(key, c_in, c_out):
    """Deterministic param init for one SAGEConv(project=True) layer."""
    ks = jax.random.split(key, 5)
    scale_p = 1.0 / jnp.sqrt(c_in)
    return {
        # projection Linear(c_in, c_in, bias=True); stored transposed (in, in)
        "wp": jax.random.uniform(ks[0], (c_in, c_in), jnp.float32,
                                 -scale_p, scale_p),
        "bp": jax.random.uniform(ks[1], (1, c_in), jnp.float32,
                                 -scale_p, scale_p),
        # lin_l Linear(c_in, c_out, bias=True); stored transposed (in, out)
        "wl": jax.random.uniform(ks[2], (c_in, c_out), jnp.float32,
                                 -scale_p, scale_p),
        "bl": jax.random.uniform(ks[3], (1, c_out), jnp.float32,
                                 -scale_p, scale_p),
        # lin_r Linear(c_in, c_out, bias=False)
        "wr": jax.random.uniform(ks[4], (c_in, c_out), jnp.float32,
                                 -scale_p, scale_p),
    }


if __name__ == "__main__":
    key = jax.random.PRNGKey(0)
    k_x, k_e, k1, k2, k3 = jax.random.split(key, 5)

    num_nodes = 16
    num_edges = 40
    in_feats = 3

    x = jax.random.normal(k_x, (num_nodes, in_feats), jnp.float32)
    edge_index = jax.random.randint(k_e, (2, num_edges), 0, num_nodes,
                                    dtype=jnp.int32)

    params = {
        "conv1": make_sage_params(k1, in_feats, 16),
        "conv2": make_sage_params(k2, 16, 16),
        "conv3": make_sage_params(k3, 16, 1),
    }

    out = jax.jit(my_model)(x, edge_index, params)
    out = jax.block_until_ready(out)
    assert out.shape == (num_nodes, 1)
    assert bool(jnp.all((out >= 0.0) & (out <= 1.0)))
    print("KERNEL_OK")
</pallas_src>

<mosaic_0001>
module attributes {stable_mosaic.version = 11 : i64} {
  func.func @_fused_sage_kernel(%arg0: i32, %arg1: memref<128x128xf32, #tpu.memory_space<vmem>>, %arg2: memref<128x128xbf16, #tpu.memory_space<vmem>>, %arg3: memref<1152x128xbf16, #tpu.memory_space<vmem>>, %arg4: memref<8x128xf32, #tpu.memory_space<vmem>>, %arg5: memref<128x128xbf16, #tpu.memory_space<vmem>>) attributes {dimension_semantics = [#tpu.dimension_semantics<arbitrary>], iteration_bounds = array<i64: 1>, scalar_prefetch = 0 : i64, scratch_operands = 0 : i64, tpu.core_type = #tpu.core_type<tc>, window_params = [{pipeline_mode = #tpu.pipeline_mode<synchronous>, transform_indices = @transform_0, window_bounds = array<i64: 128, 128>}, {pipeline_mode = #tpu.pipeline_mode<synchronous>, transform_indices = @transform_1, window_bounds = array<i64: 128, 128>}, {pipeline_mode = #tpu.pipeline_mode<synchronous>, transform_indices = @transform_2, window_bounds = array<i64: 1152, 128>}, {pipeline_mode = #tpu.pipeline_mode<synchronous>, transform_indices = @transform_3, window_bounds = array<i64: 8, 128>}, {pipeline_mode = #tpu.pipeline_mode<synchronous>, transform_indices = @transform_4, window_bounds = array<i64: 128, 128>}]} {
    %c0 = arith.constant 0 : index
    %c0_0 = arith.constant 0 : index
    %0 = vector.load %arg2[%c0, %c0_0] : memref<128x128xbf16, #tpu.memory_space<vmem>>, vector<128x128xbf16>
    %c0_1 = arith.constant 0 : index
    %c0_2 = arith.constant 0 : index
    %1 = vector.load %arg1[%c0_1, %c0_2] : memref<128x128xf32, #tpu.memory_space<vmem>>, vector<128x128xf32>
    %c0_3 = arith.constant 0 : index
    %c0_4 = arith.constant 0 : index
    %2 = vector.load %arg3[%c0_3, %c0_4] : memref<1152x128xbf16, #tpu.memory_space<vmem>>, vector<128x128xbf16>
    %c128 = arith.constant 128 : index
    %c0_5 = arith.constant 0 : index
    %3 = vector.load %arg3[%c128, %c0_5] : memref<1152x128xbf16, #tpu.memory_space<vmem>>, vector<256x128xbf16>
    %c0_6 = arith.constant 0 : index
    %c0_7 = arith.constant 0 : index
    %4 = vector.load %arg4[%c0_6, %c0_7] : memref<8x128xf32, #tpu.memory_space<vmem>>, vector<1x128xf32>
    %c1 = arith.constant 1 : index
    %c0_8 = arith.constant 0 : index
    %5 = vector.load %arg4[%c1, %c0_8] : memref<8x128xf32, #tpu.memory_space<vmem>>, vector<1x128xf32>
    %6 = arith.truncf %1 : vector<128x128xf32> to vector<128x128xbf16>
    %cst = arith.constant dense<0.000000e+00> : vector<128x128xf32>
    %7 = tpu.matmul %6, %2, %cst {dimension_numbers = #tpu.dot_dimension_numbers<[1], [0], [0], [1], [0, 0, 1, 1], [], []>} : vector<128x128xbf16>, vector<128x128xbf16>, vector<128x128xf32> -> vector<128x128xf32>
    %8 = vector.broadcast %4 : vector<1x128xf32> to vector<128x128xf32>
    %9 = arith.addf %7, %8 : vector<128x128xf32>
    %cst_9 = arith.constant 0.000000e+00 : f32
    %10 = vector.broadcast %cst_9 : f32 to vector<128x128xf32>
    %11 = arith.maximumf %9, %10 : vector<128x128xf32>
    %12 = arith.truncf %11 : vector<128x128xf32> to vector<128x128xbf16>
    %cst_10 = arith.constant dense<0.000000e+00> : vector<128x128xf32>
    %13 = tpu.matmul %0, %12, %cst_10 {dimension_numbers = #tpu.dot_dimension_numbers<[1], [0], [0], [1], [0, 0, 1, 1], [], []>} : vector<128x128xbf16>, vector<128x128xbf16>, vector<128x128xf32> -> vector<128x128xf32>
    %14 = arith.truncf %13 : vector<128x128xf32> to vector<128x128xbf16>
    %15 = tpu.concatenate %14, %6 in 1 : vector<128x128xbf16>, vector<128x128xbf16> -> vector<128x256xbf16>
    %cst_11 = arith.constant dense<0.000000e+00> : vector<128x128xf32>
    %16 = tpu.matmul %15, %3, %cst_11 {dimension_numbers = #tpu.dot_dimension_numbers<[1], [0], [0], [1], [0, 0, 1, 1], [], []>} : vector<128x256xbf16>, vector<256x128xbf16>, vector<128x128xf32> -> vector<128x128xf32>
    %17 = vector.broadcast %5 : vector<1x128xf32> to vector<128x128xf32>
    %18 = arith.addf %16, %17 : vector<128x128xf32>
    %cst_12 = arith.constant 0.000000e+00 : f32
    %19 = vector.broadcast %cst_12 : f32 to vector<128x128xf32>
    %20 = arith.maximumf %18, %19 : vector<128x128xf32>
    %c384 = arith.constant 384 : index
    %c0_13 = arith.constant 0 : index
    %21 = vector.load %arg3[%c384, %c0_13] : memref<1152x128xbf16, #tpu.memory_space<vmem>>, vector<128x128xbf16>
    %c512 = arith.constant 512 : index
    %c0_14 = arith.constant 0 : index
    %22 = vector.load %arg3[%c512, %c0_14] : memref<1152x128xbf16, #tpu.memory_space<vmem>>, vector<256x128xbf16>
    %c2 = arith.constant 2 : index
    %c0_15 = arith.constant 0 : index
    %23 = vector.load %arg4[%c2, %c0_15] : memref<8x128xf32, #tpu.memory_space<vmem>>, vector<1x128xf32>
    %c3 = arith.constant 3 : index
    %c0_16 = arith.constant 0 : index
    %24 = vector.load %arg4[%c3, %c0_16] : memref<8x128xf32, #tpu.memory_space<vmem>>, vector<1x128xf32>
    %25 = arith.truncf %20 : vector<128x128xf32> to vector<128x128xbf16>
    %cst_17 = arith.constant dense<0.000000e+00> : vector<128x128xf32>
    %26 = tpu.matmul %25, %21, %cst_17 {dimension_numbers = #tpu.dot_dimension_numbers<[1], [0], [0], [1], [0, 0, 1, 1], [], []>} : vector<128x128xbf16>, vector<128x128xbf16>, vector<128x128xf32> -> vector<128x128xf32>
    %27 = vector.broadcast %23 : vector<1x128xf32> to vector<128x128xf32>
    %28 = arith.addf %26, %27 : vector<128x128xf32>
    %cst_18 = arith.constant 0.000000e+00 : f32
    %29 = vector.broadcast %cst_18 : f32 to vector<128x128xf32>
    %30 = arith.maximumf %28, %29 : vector<128x128xf32>
    %31 = arith.truncf %30 : vector<128x128xf32> to vector<128x128xbf16>
    %cst_19 = arith.constant dense<0.000000e+00> : vector<128x128xf32>
    %32 = tpu.matmul %0, %31, %cst_19 {dimension_numbers = #tpu.dot_dimension_numbers<[1], [0], [0], [1], [0, 0, 1, 1], [], []>} : vector<128x128xbf16>, vector<128x128xbf16>, vector<128x128xf32> -> vector<128x128xf32>
    %33 = arith.truncf %32 : vector<128x128xf32> to vector<128x128xbf16>
    %34 = tpu.concatenate %33, %25 in 1 : vector<128x128xbf16>, vector<128x128xbf16> -> vector<128x256xbf16>
    %cst_20 = arith.constant dense<0.000000e+00> : vector<128x128xf32>
    %35 = tpu.matmul %34, %22, %cst_20 {dimension_numbers = #tpu.dot_dimension_numbers<[1], [0], [0], [1], [0, 0, 1, 1], [], []>} : vector<128x256xbf16>, vector<256x128xbf16>, vector<128x128xf32> -> vector<128x128xf32>
    %36 = vector.broadcast %24 : vector<1x128xf32> to vector<128x128xf32>
    %37 = arith.addf %35, %36 : vector<128x128xf32>
    %cst_21 = arith.constant 0.000000e+00 : f32
    %38 = vector.broadcast %cst_21 : f32 to vector<128x128xf32>
    %39 = arith.maximumf %37, %38 : vector<128x128xf32>
    %c768 = arith.constant 768 : index
    %c0_22 = arith.constant 0 : index
    %40 = vector.load %arg3[%c768, %c0_22] : memref<1152x128xbf16, #tpu.memory_space<vmem>>, vector<128x128xbf16>
    %c896 = arith.constant 896 : index
    %c0_23 = arith.constant 0 : index
    %41 = vector.load %arg3[%c896, %c0_23] : memref<1152x128xbf16, #tpu.memory_space<vmem>>, vector<256x128xbf16>
    %c4 = arith.constant 4 : index
    %c0_24 = arith.constant 0 : index
    %42 = vector.load %arg4[%c4, %c0_24] : memref<8x128xf32, #tpu.memory_space<vmem>>, vector<1x128xf32>
    %c5 = arith.constant 5 : index
    %c0_25 = arith.constant 0 : index
    %43 = vector.load %arg4[%c5, %c0_25] : memref<8x128xf32, #tpu.memory_space<vmem>>, vector<1x128xf32>
    %44 = arith.truncf %39 : vector<128x128xf32> to vector<128x128xbf16>
    %cst_26 = arith.constant dense<0.000000e+00> : vector<128x128xf32>
    %45 = tpu.matmul %44, %40, %cst_26 {dimension_numbers = #tpu.dot_dimension_numbers<[1], [0], [0], [1], [0, 0, 1, 1], [], []>} : vector<128x128xbf16>, vector<128x128xbf16>, vector<128x128xf32> -> vector<128x128xf32>
    %46 = vector.broadcast %42 : vector<1x128xf32> to vector<128x128xf32>
    %47 = arith.addf %45, %46 : vector<128x128xf32>
    %cst_27 = arith.constant 0.000000e+00 : f32
    %48 = vector.broadcast %cst_27 : f32 to vector<128x128xf32>
    %49 = arith.maximumf %47, %48 : vector<128x128xf32>
    %50 = arith.truncf %49 : vector<128x128xf32> to vector<128x128xbf16>
    %cst_28 = arith.constant dense<0.000000e+00> : vector<128x128xf32>
    %51 = tpu.matmul %0, %50, %cst_28 {dimension_numbers = #tpu.dot_dimension_numbers<[1], [0], [0], [1], [0, 0, 1, 1], [], []>} : vector<128x128xbf16>, vector<128x128xbf16>, vector<128x128xf32> -> vector<128x128xf32>
    %52 = arith.truncf %51 : vector<128x128xf32> to vector<128x128xbf16>
    %53 = tpu.concatenate %52, %44 in 1 : vector<128x128xbf16>, vector<128x128xbf16> -> vector<128x256xbf16>
    %cst_29 = arith.constant dense<0.000000e+00> : vector<128x128xf32>
    %54 = tpu.matmul %53, %41, %cst_29 {dimension_numbers = #tpu.dot_dimension_numbers<[1], [0], [0], [1], [0, 0, 1, 1], [], []>} : vector<128x256xbf16>, vector<256x128xbf16>, vector<128x128xf32> -> vector<128x128xf32>
    %55 = vector.broadcast %43 : vector<1x128xf32> to vector<128x128xf32>
    %56 = arith.addf %54, %55 : vector<128x128xf32>
    %57 = arith.negf %56 : vector<128x128xf32>
    %58 = math.exp %57 : vector<128x128xf32>
    %cst_30 = arith.constant 1.000000e+00 : f32
    %59 = vector.broadcast %cst_30 : f32 to vector<128x128xf32>
    %60 = arith.addf %59, %58 : vector<128x128xf32>
    %61 = arith.divf %59, %60 : vector<128x128xf32>
    %62 = arith.truncf %61 : vector<128x128xf32> to vector<128x128xbf16>
    %c0_31 = arith.constant 0 : index
    %c0_32 = arith.constant 0 : index
    %63 = vector.load %arg5[%c0_31, %c0_32] : memref<128x128xbf16, #tpu.memory_space<vmem>>, vector<128x128xbf16>
    tpu.vector_store %arg5[%c0_31, %c0_32], %62 {strides = array<i32>} : memref<128x128xbf16, #tpu.memory_space<vmem>>, vector<128x128xbf16>,
    return
  }
  func.func @transform_0(%arg0: i32) -> (i32, i32) {
    %c0_i32 = arith.constant 0 : i32
    %c0_i32_0 = arith.constant 0 : i32
    %c0_i32_1 = arith.constant 0 : i32
    return %c0_i32, %c0_i32_0 : i32, i32
  }
  func.func @transform_1(%arg0: i32) -> (i32, i32) {
    %c0_i32 = arith.constant 0 : i32
    %c0_i32_0 = arith.constant 0 : i32
    %c0_i32_1 = arith.constant 0 : i32
    return %c0_i32, %c0_i32_0 : i32, i32
  }
  func.func @transform_2(%arg0: i32) -> (i32, i32) {
    %c0_i32 = arith.constant 0 : i32
    %c0_i32_0 = arith.constant 0 : i32
    %c0_i32_1 = arith.constant 0 : i32
    return %c0_i32, %c0_i32_0 : i32, i32
  }
  func.func @transform_3(%arg0: i32) -> (i32, i32) {
    %c0_i32 = arith.constant 0 : i32
    %c0_i32_0 = arith.constant 0 : i32
    %c0_i32_1 = arith.constant 0 : i32
    return %c0_i32, %c0_i32_0 : i32, i32
  }
  func.func @transform_4(%arg0: i32) -> (i32, i32) {
    %c0_i32 = arith.constant 0 : i32
    %c0_i32_0 = arith.constant 0 : i32
    %c0_i32_1 = arith.constant 0 : i32
    return %c0_i32, %c0_i32_0 : i32, i32
  }
}

</mosaic_0001>

<llo_original>
// kernel: my_model.1
$region0: #{my_model.1}
  #allocation0 [shape = 'u32[]', space=smem, size = 0x4, offset = 0x4, fixed_abs, tag = 'smem constant byte address 0x4 - core index']
  #allocation1 [shape = 'u32[144,128]{1,0:T(1,128)}', space=vmem, size = 0x12000, scoped, tag = 'internal scratch']
  %s0 = inlined_call_operand.vmem [shape: f32[128,128], index: 0, kind: input, shape index: {}]
  %s1 = inlined_call_operand.vmem [shape: bf16[128,128], index: 1, kind: input, shape index: {}]
  %s2 = inlined_call_operand.vmem [shape: bf16[1152,128], index: 2, kind: input, shape index: {}]
  %s3 = inlined_call_operand.vmem [shape: f32[8,128], index: 3, kind: input, shape index: {}]
  %s4 = inlined_call_operand.vmem [shape: bf16[128,128], index: 4, kind: output, shape index: {}]
  %s5 = sld [smem:[#allocation0]]
  $region26: #{my_model.1} parent=0
    _
  %s7 = ssub.s32 1, %s5
  %s8 = scalar_select 0, %s7, %s5
  // Predicated region
  $region2: #{my_model.1} parent=0 // pred_check
    _
  $region3: #{my_model.1} parent=0 // pred_check_branch
    %10 = sbr.rel (0) target = $region5
  $region4: #{my_model.1} parent=0 // pred_region
    _
  $region5: #{my_model.1} parent=0 // pred_fallthru
    _
  // Predicated region
  $region6: #{my_model.1} parent=0 // pred_check
    _
  $region7: #{my_model.1} parent=0 // pred_check_branch
    %12 = sbr.rel (0) target = $region9
  $region8: #{my_model.1} parent=0 // pred_region
    _
  $region9: #{my_model.1} parent=0 // pred_fallthru
    _
  // Predicated region
  $region10: #{my_model.1} parent=0 // pred_check
    _
  $region11: #{my_model.1} parent=0 // pred_check_branch
    %14 = sbr.rel (0) target = $region13
  $region12: #{my_model.1} parent=0 // pred_region
    _
  $region13: #{my_model.1} parent=0 // pred_fallthru
    _
  // Predicated region
  $region14: #{my_model.1} parent=0 // pred_check
    _
  $region15: #{my_model.1} parent=0 // pred_check_branch
    %16 = sbr.rel (0) target = $region17
  $region16: #{my_model.1} parent=0 // pred_region
    _
  $region17: #{my_model.1} parent=0 // pred_fallthru
    _
  %v18 = vld [vmem:[%s1] sm:$0xf]
  %v19 = vld [vmem:[%s1 + $0x4] sm:$0xf]
  %v20 = vld [vmem:[%s1 + $0x8] sm:$0xf]
  %v21 = vld [vmem:[%s1 + $0xc] sm:$0xf]
  %v22 = vld [vmem:[%s1 + $0x10] sm:$0xf]
  %v23 = vld [vmem:[%s1 + $0x14] sm:$0xf]
  %v24 = vld [vmem:[%s1 + $0x18] sm:$0xf]
  %v25 = vld [vmem:[%s1 + $0x1c] sm:$0xf]
  %v26 = vld [vmem:[%s1 + $0x20] sm:$0xf]
  %v27 = vld [vmem:[%s1 + $0x24] sm:$0xf]
  %v28 = vld [vmem:[%s1 + $0x28] sm:$0xf]
  %v29 = vld [vmem:[%s1 + $0x2c] sm:$0xf]
  %v30 = vld [vmem:[%s1 + $0x30] sm:$0xf]
  %v31 = vld [vmem:[%s1 + $0x34] sm:$0xf]
  %v32 = vld [vmem:[%s1 + $0x38] sm:$0xf]
  %v33 = vld [vmem:[%s1 + $0x3c] sm:$0xf]
  %v34 = vld [vmem:[%s0] sm:$0xff]
  %v35 = vld [vmem:[%s0 + $0x8] sm:$0xff]
  %v36 = vld [vmem:[%s0 + $0x10] sm:$0xff]
  %v37 = vld [vmem:[%s0 + $0x18] sm:$0xff]
  %v38 = vld [vmem:[%s0 + $0x20] sm:$0xff]
  %v39 = vld [vmem:[%s0 + $0x28] sm:$0xff]
  %v40 = vld [vmem:[%s0 + $0x30] sm:$0xff]
  %v41 = vld [vmem:[%s0 + $0x38] sm:$0xff]
  %v42 = vld [vmem:[%s0 + $0x40] sm:$0xff]
  %v43 = vld [vmem:[%s0 + $0x48] sm:$0xff]
  %v44 = vld [vmem:[%s0 + $0x50] sm:$0xff]
  %v45 = vld [vmem:[%s0 + $0x58] sm:$0xff]
  %v46 = vld [vmem:[%s0 + $0x60] sm:$0xff]
  %v47 = vld [vmem:[%s0 + $0x68] sm:$0xff]
  %v48 = vld [vmem:[%s0 + $0x70] sm:$0xff]
  %v49 = vld [vmem:[%s0 + $0x78] sm:$0xff]
  %v50 = vld [vmem:[%s2] sm:$0xf]
  %v51 = vld [vmem:[%s2 + $0x4] sm:$0xf]
  %v52 = vld [vmem:[%s2 + $0x8] sm:$0xf]
  %v53 = vld [vmem:[%s2 + $0xc] sm:$0xf]
  %v54 = vld [vmem:[%s2 + $0x10] sm:$0xf]
  %v55 = vld [vmem:[%s2 + $0x14] sm:$0xf]
  %v56 = vld [vmem:[%s2 + $0x18] sm:$0xf]
  %v57 = vld [vmem:[%s2 + $0x1c] sm:$0xf]
  %v58 = vld [vmem:[%s2 + $0x20] sm:$0xf]
  %v59 = vld [vmem:[%s2 + $0x24] sm:$0xf]
  %v60 = vld [vmem:[%s2 + $0x28] sm:$0xf]
  %v61 = vld [vmem:[%s2 + $0x2c] sm:$0xf]
  %v62 = vld [vmem:[%s2 + $0x30] sm:$0xf]
  %v63 = vld [vmem:[%s2 + $0x34] sm:$0xf]
  %v64 = vld [vmem:[%s2 + $0x38] sm:$0xf]
  %v65 = vld [vmem:[%s2 + $0x3c] sm:$0xf]
  %v66 = vld [vmem:[%s2 + $0x40] sm:$0xf]
  %v67 = vld [vmem:[%s2 + $0x44] sm:$0xf]
  %v68 = vld [vmem:[%s2 + $0x48] sm:$0xf]
  %v69 = vld [vmem:[%s2 + $0x4c] sm:$0xf]
  %v70 = vld [vmem:[%s2 + $0x50] sm:$0xf]
  %v71 = vld [vmem:[%s2 + $0x54] sm:$0xf]
  %v72 = vld [vmem:[%s2 + $0x58] sm:$0xf]
  %v73 = vld [vmem:[%s2 + $0x5c] sm:$0xf]
  %v74 = vld [vmem:[%s2 + $0x60] sm:$0xf]
  %v75 = vld [vmem:[%s2 + $0x64] sm:$0xf]
  %v76 = vld [vmem:[%s2 + $0x68] sm:$0xf]
  %v77 = vld [vmem:[%s2 + $0x6c] sm:$0xf]
  %v78 = vld [vmem:[%s2 + $0x70] sm:$0xf]
  %v79 = vld [vmem:[%s2 + $0x74] sm:$0xf]
  %v80 = vld [vmem:[%s2 + $0x78] sm:$0xf]
  %v81 = vld [vmem:[%s2 + $0x7c] sm:$0xf]
  %v82 = vld [vmem:[%s2 + $0x80] sm:$0xf]
  %v83 = vld [vmem:[%s2 + $0x84] sm:$0xf]
  %v84 = vld [vmem:[%s2 + $0x88] sm:$0xf]
  %v85 = vld [vmem:[%s2 + $0x8c] sm:$0xf]
  %v86 = vld [vmem:[%s2 + $0x90] sm:$0xf]
  %v87 = vld [vmem:[%s2 + $0x94] sm:$0xf]
  %v88 = vld [vmem:[%s2 + $0x98] sm:$0xf]
  %v89 = vld [vmem:[%s2 + $0x9c] sm:$0xf]
  %v90 = vld [vmem:[%s2 + $0xa0] sm:$0xf]
  %v91 = vld [vmem:[%s2 + $0xa4] sm:$0xf]
  %v92 = vld [vmem:[%s2 + $0xa8] sm:$0xf]
  %v93 = vld [vmem:[%s2 + $0xac] sm:$0xf]
  %v94 = vld [vmem:[%s2 + $0xb0] sm:$0xf]
  %v95 = vld [vmem:[%s2 + $0xb4] sm:$0xf]
  %v96 = vld [vmem:[%s2 + $0xb8] sm:$0xf]
  %v97 = vld [vmem:[%s2 + $0xbc] sm:$0xf]
  %v98 = vld [vmem:[%s3] sm:$0x1]
  %v99 = vld [vmem:[%s3 + $0x1] sm:$0x1]
  %v100 = vpack.c.bf16 %v35, %v34
  %v101 = vpack.c.bf16 %v37, %v36
  %v102 = vpack.c.bf16 %v39, %v38
  %v103 = vpack.c.bf16 %v41, %v40
  %v104 = vpack.c.bf16 %v43, %v42
  %v105 = vpack.c.bf16 %v45, %v44
  %v106 = vpack.c.bf16 %v47, %v46
  %v107 = vpack.c.bf16 %v49, %v48
  %v108 = vlaneseq
  %v109 = vshrl.u32 %v108, 7
  %v110 = vsub.s32 0, %v109
  %v111 = vrot.slane %v98, %v110
  %v128 = vunpack.c.l.b16 %v50
  %v129 = vunpack.c.l.b16 %v51
  %v130 = vunpack.c.l.b16 %v52
  %v131 = vunpack.c.l.b16 %v53
  %v132 = vunpack.c.l.b16 %v54
  %v133 = vunpack.c.l.b16 %v55
  %v134 = vunpack.c.l.b16 %v56
  %v135 = vunpack.c.l.b16 %v57
  %v136 = vunpack.c.l.b16 %v58
  %v137 = vunpack.c.l.b16 %v59
  %v138 = vunpack.c.l.b16 %v60
  %v139 = vunpack.c.l.b16 %v61
  %v140 = vunpack.c.l.b16 %v62
  %v141 = vunpack.c.l.b16 %v63
  %v142 = vunpack.c.l.b16 %v64
  %v143 = vunpack.c.l.b16 %v65
  %v144 = vpack.c.b16 %v129, %v128
  %v145 = vpack.c.b16 %v131, %v130
  %v146 = vpack.c.b16 %v133, %v132
  %v147 = vpack.c.b16 %v135, %v134
  %v148 = vpack.c.b16 %v137, %v136
  %v149 = vpack.c.b16 %v139, %v138
  %v150 = vpack.c.b16 %v141, %v140
  %v151 = vpack.c.b16 %v143, %v142
  %160 = vmatprep.subr.bf16.mxu0 0
  %161 = vmatpush1.bf16.msra.mxu0 %v144
  %162 = vmatprep.subr.bf16.mxu0 0
  %163 = vmatpush1.bf16.msra.mxu0 %v145
  %164 = vmatprep.subr.bf16.mxu0 0
  %165 = vmatpush1.bf16.msra.mxu0 %v146
  %166 = vmatprep.subr.bf16.mxu0 0
  %167 = vmatpush1.bf16.msra.mxu0 %v147
  %168 = vmatprep.subr.bf16.mxu0 0
  %169 = vmatpush1.bf16.msra.mxu0 %v148
  %170 = vmatprep.subr.bf16.mxu0 0
  %171 = vmatpush1.bf16.msra.mxu0 %v149
  %172 = vmatprep.subr.bf16.mxu0 0
  %173 = vmatpush1.bf16.msra.mxu0 %v150
  %174 = vmatprep.subr.bf16.mxu0 0
  %175 = vmatpush1.bf16.msra.mxu0 %v151
  %176 = vmatprep.subr.bf16.mxu0 0
  %177 = vmatpush1.bf16.msra.mxu0 0
  %178 = vmatprep.subr.bf16.mxu0 0
  %179 = vmatpush1.bf16.msra.mxu0 0
  %180 = vmatprep.subr.bf16.mxu0 0
  %181 = vmatpush1.bf16.msra.mxu0 0
  %182 = vmatprep.subr.bf16.mxu0 0
  %183 = vmatpush1.bf16.msra.mxu0 0
  %184 = vmatprep.subr.bf16.mxu0 0
  %185 = vmatpush1.bf16.msra.mxu0 0
  %186 = vmatprep.subr.bf16.mxu0 0
  %187 = vmatpush1.bf16.msra.mxu0 0
  %188 = vmatprep.subr.bf16.mxu0 0
  %189 = vmatpush1.bf16.msra.mxu0 0
  %190 = vmatprep.subr.bf16.mxu0 0
  %191 = vmatpush1.bf16.msra.mxu0 0
  %192 = vmatprep.mubr.bf16.mxu0 0
  %193 = vmatmul.mubr.bf16.gmra.mrb[0].mxu0 %v100
  %v194 = vpop.f32.mrb[0].mxu0
  %v195 = vadd.f32 %v111, %v194
  %v196 = vpop.f32.mrb[0].mxu0
  %v197 = vpop.f32.mrb[0].mxu0
  %v198 = vadd.f32 %v111, %v197
  %v199 = vpop.f32.mrb[0].mxu0
  %200 = vmatprep.mubr.bf16.mxu0 0
  %201 = vmatmul.mubr.bf16.gmra.mrb[0].mxu0 %v101
  %v202 = vpop.f32.mrb[0].mxu0
  %v203 = vadd.f32 %v111, %v202
  %v204 = vpop.f32.mrb[0].mxu0
  %v205 = vpop.f32.mrb[0].mxu0
  %v206 = vadd.f32 %v111, %v205
  %v207 = vpop.f32.mrb[0].mxu0
  %208 = vmatprep.mubr.bf16.mxu0 0
  %209 = vmatmul.mubr.bf16.gmra.mrb[0].mxu0 %v102
  %v210 = vpop.f32.mrb[0].mxu0
  %v211 = vadd.f32 %v111, %v210
  %v212 = vpop.f32.mrb[0].mxu0
  %v213 = vpop.f32.mrb[0].mxu0
  %v214 = vadd.f32 %v111, %v213
  %v215 = vpop.f32.mrb[0].mxu0
  %216 = vmatprep.mubr.bf16.mxu0 0
  %217 = vmatmul.mubr.bf16.gmra.mrb[0].mxu0 %v103
  %v218 = vpop.f32.mrb[0].mxu0
  %v219 = vadd.f32 %v111, %v218
  %v220 = vpop.f32.mrb[0].mxu0
  %v221 = vpop.f32.mrb[0].mxu0
  %v222 = vadd.f32 %v111, %v221
  %v223 = vpop.f32.mrb[0].mxu0
  %224 = vmatprep.mubr.bf16.mxu0 0
  %225 = vmatmul.mubr.bf16.gmra.mrb[0].mxu0 %v104
  %v226 = vpop.f32.mrb[0].mxu0
  %v227 = vadd.f32 %v111, %v226
  %v228 = vpop.f32.mrb[0].mxu0
  %v229 = vpop.f32.mrb[0].mxu0
  %v230 = vadd.f32 %v111, %v229
  %v231 = vpop.f32.mrb[0].mxu0
  %232 = vmatprep.mubr.bf16.mxu0 0
  %233 = vmatmul.mubr.bf16.gmra.mrb[0].mxu0 %v105
  %v234 = vpop.f32.mrb[0].mxu0
  %v235 = vadd.f32 %v111, %v234
  %v236 = vpop.f32.mrb[0].mxu0
  %v237 = vpop.f32.mrb[0].mxu0
  %v238 = vadd.f32 %v111, %v237
  %v239 = vpop.f32.mrb[0].mxu0
  %240 = vmatprep.mubr.bf16.mxu0 0
  %241 = vmatmul.mubr.bf16.gmra.mrb[0].mxu0 %v106
  %v242 = vpop.f32.mrb[0].mxu0
  %v243 = vadd.f32 %v111, %v242
  %v244 = vpop.f32.mrb[0].mxu0
  %v245 = vpop.f32.mrb[0].mxu0
  %v246 = vadd.f32 %v111, %v245
  %v247 = vpop.f32.mrb[0].mxu0
  %248 = vmatprep.mubr.bf16.mxu0 0
  %249 = vmatmul.mubr.bf16.gmra.mrb[0].mxu0 %v107
  %v250 = vpop.f32.mrb[0].mxu0
  %v251 = vadd.f32 %v111, %v250
  %v252 = vpop.f32.mrb[0].mxu0
  %v253 = vpop.f32.mrb[0].mxu0
  %v254 = vadd.f32 %v111, %v253
  %v255 = vpop.f32.mrb[0].mxu0
  %256 = vdwg.mxu0
  %v257 = vmax.f32 %v195, 0.0
  %v258 = vmax.f32 %v198, 0.0
  %v259 = vmax.f32 %v203, 0.0
  %v260 = vmax.f32 %v206, 0.0
  %v261 = vmax.f32 %v211, 0.0
  %v262 = vmax.f32 %v214, 0.0
  %v263 = vmax.f32 %v219, 0.0
  %v264 = vmax.f32 %v222, 0.0
  %v265 = vmax.f32 %v227, 0.0
  %v266 = vmax.f32 %v230, 0.0
  %v267 = vmax.f32 %v235, 0.0
  %v268 = vmax.f32 %v238, 0.0
  %v269 = vmax.f32 %v243, 0.0
  %v270 = vmax.f32 %v246, 0.0
  %v271 = vmax.f32 %v251, 0.0
  %v272 = vmax.f32 %v254, 0.0
  %v273 = vpack.c.bf16 %v258, %v257
  %v274 = vpack.c.bf16 %v260, %v259
  %v275 = vpack.c.bf16 %v262, %v261
  %v276 = vpack.c.bf16 %v264, %v263
  %v277 = vpack.c.bf16 %v266, %v265
  %v278 = vpack.c.bf16 %v268, %v267
  %v279 = vpack.c.bf16 %v270, %v269
  %v280 = vpack.c.bf16 %v272, %v271
  %v297 = vunpack.c.l.b16 %v18
  %v298 = vunpack.c.l.b16 %v19
  %v299 = vunpack.c.l.b16 %v20
  %v300 = vunpack.c.l.b16 %v21
  %v301 = vunpack.c.l.b16 %v22
  %v302 = vunpack.c.l.b16 %v23
  %v303 = vunpack.c.l.b16 %v24
  %v304 = vunpack.c.l.b16 %v25
  %v305 = vunpack.c.l.b16 %v26
  %v306 = vunpack.c.l.b16 %v27
  %v307 = vunpack.c.l.b16 %v28
  %v308 = vunpack.c.l.b16 %v29
  %v309 = vunpack.c.l.b16 %v30
  %v310 = vunpack.c.l.b16 %v31
  %v311 = vunpack.c.l.b16 %v32
  %v312 = vunpack.c.l.b16 %v33
  %v313 = vpack.c.b16 %v298, %v297
  %v314 = vpack.c.b16 %v300, %v299
  %v315 = vpack.c.b16 %v302, %v301
  %v316 = vpack.c.b16 %v304, %v303
  %v317 = vpack.c.b16 %v306, %v305
  %v318 = vpack.c.b16 %v308, %v307
  %v319 = vpack.c.b16 %v310, %v309
  %v320 = vpack.c.b16 %v312, %v311
  %329 = vmatprep.subr.bf16.mxu0 0
  %330 = vmatpush1.bf16.msra.mxu0 %v273
  %331 = vmatprep.subr.bf16.mxu0 0
  %332 = vmatpush1.bf16.msra.mxu0 %v274
  %333 = vmatprep.subr.bf16.mxu0 0
  %334 = vmatpush1.bf16.msra.mxu0 %v275
  %335 = vmatprep.subr.bf16.mxu0 0
  %336 = vmatpush1.bf16.msra.mxu0 %v276
  %337 = vmatprep.subr.bf16.mxu0 0
  %338 = vmatpush1.bf16.msra.mxu0 %v277
  %339 = vmatprep.subr.bf16.mxu0 0
  %340 = vmatpush1.bf16.msra.mxu0 %v278
  %341 = vmatprep.subr.bf16.mxu0 0
  %342 = vmatpush1.bf16.msra.mxu0 %v279
  %343 = vmatprep.subr.bf16.mxu0 0
  %344 = vmatpush1.bf16.msra.mxu0 %v280
  %345 = vmatprep.subr.bf16.mxu0 0
  %346 = vmatpush1.bf16.msra.mxu0 0
  %347 = vmatprep.subr.bf16.mxu0 0
  %348 = vmatpush1.bf16.msra.mxu0 0
  %349 = vmatprep.subr.bf16.mxu0 0
  %350 = vmatpush1.bf16.msra.mxu0 0
  %351 = vmatprep.subr.bf16.mxu0 0
  %352 = vmatpush1.bf16.msra.mxu0 0
  %353 = vmatprep.subr.bf16.mxu0 0
  %354 = vmatpush1.bf16.msra.mxu0 0
  %355 = vmatprep.subr.bf16.mxu0 0
  %356 = vmatpush1.bf16.msra.mxu0 0
  %357 = vmatprep.subr.bf16.mxu0 0
  %358 = vmatpush1.bf16.msra.mxu0 0
  %359 = vmatprep.subr.bf16.mxu0 0
  %360 = vmatpush1.bf16.msra.mxu0 0
  %361 = vmatprep.mubr.bf16.mxu0 0
  %362 = vmatmul.mubr.bf16.gmra.mrb[0].mxu0 %v313
  %v363 = vpop.f32.mrb[0].mxu0
  %v364 = vadd.f32 0.0, %v363
  %v365 = vpop.f32.mrb[0].mxu0
  %v366 = vpop.f32.mrb[0].mxu0
  %v367 = vadd.f32 0.0, %v366
  %v368 = vpop.f32.mrb[0].mxu0
  %369 = vmatprep.mubr.bf16.mxu0 0
  %370 = vmatmul.mubr.bf16.gmra.mrb[0].mxu0 %v314
  %v371 = vpop.f32.mrb[0].mxu0
  %v372 = vadd.f32 0.0, %v371
  %v373 = vpop.f32.mrb[0].mxu0
  %v374 = vpop.f32.mrb[0].mxu0
  %v375 = vadd.f32 0.0, %v374
  %v376 = vpop.f32.mrb[0].mxu0
  %377 = vmatprep.mubr.bf16.mxu0 0
  %378 = vmatmul.mubr.bf16.gmra.mrb[0].mxu0 %v315
  %v379 = vpop.f32.mrb[0].mxu0
  %v380 = vadd.f32 0.0, %v379
  %v381 = vpop.f32.mrb[0].mxu0
  %v382 = vpop.f32.mrb[0].mxu0
  %v383 = vadd.f32 0.0, %v382
  %v384 = vpop.f32.mrb[0].mxu0
  %385 = vmatprep.mubr.bf16.mxu0 0
  %386 = vmatmul.mubr.bf16.gmra.mrb[0].mxu0 %v316
  %v387 = vpop.f32.mrb[0].mxu0
  %v388 = vadd.f32 0.0, %v387
  %v389 = vpop.f32.mrb[0].mxu0
  %v390 = vpop.f32.mrb[0].mxu0
  %v391 = vadd.f32 0.0, %v390
  %v392 = vpop.f32.mrb[0].mxu0
  %393 = vmatprep.mubr.bf16.mxu0 0
  %394 = vmatmul.mubr.bf16.gmra.mrb[0].mxu0 %v317
  %v395 = vpop.f32.mrb[0].mxu0
  %v396 = vadd.f32 0.0, %v395
  %v397 = vpop.f32.mrb[0].mxu0
  %v398 = vpop.f32.mrb[0].mxu0
  %v399 = vadd.f32 0.0, %v398
  %v400 = vpop.f32.mrb[0].mxu0
  %401 = vmatprep.mubr.bf16.mxu0 0
  %402 = vmatmul.mubr.bf16.gmra.mrb[0].mxu0 %v318
  %v403 = vpop.f32.mrb[0].mxu0
  %v404 = vadd.f32 0.0, %v403
  %v405 = vpop.f32.mrb[0].mxu0
  %v406 = vpop.f32.mrb[0].mxu0
  %v407 = vadd.f32 0.0, %v406
  %v408 = vpop.f32.mrb[0].mxu0
  %409 = vmatprep.mubr.bf16.mxu0 0
  %410 = vmatmul.mubr.bf16.gmra.mrb[0].mxu0 %v319
  %v411 = vpop.f32.mrb[0].mxu0
  %v412 = vadd.f32 0.0, %v411
  %v413 = vpop.f32.mrb[0].mxu0
  %v414 = vpop.f32.mrb[0].mxu0
  %v415 = vadd.f32 0.0, %v414
  %v416 = vpop.f32.mrb[0].mxu0
  %417 = vmatprep.mubr.bf16.mxu0 0
  %418 = vmatmul.mubr.bf16.gmra.mrb[0].mxu0 %v320
  %v419 = vpop.f32.mrb[0].mxu0
  %v420 = vadd.f32 0.0, %v419
  %v421 = vpop.f32.mrb[0].mxu0
  %v422 = vpop.f32.mrb[0].mxu0
  %v423 = vadd.f32 0.0, %v422
  %v424 = vpop.f32.mrb[0].mxu0
  %425 = vdwg.mxu0
  %v426 = vpack.c.bf16 %v367, %v364
  %v427 = vpack.c.bf16 %v375, %v372
  %v428 = vpack.c.bf16 %v383, %v380
  %v429 = vpack.c.bf16 %v391, %v388
  %v430 = vpack.c.bf16 %v399, %v396
  %v431 = vpack.c.bf16 %v407, %v404
  %v432 = vpack.c.bf16 %v415, %v412
  %v433 = vpack.c.bf16 %v423, %v420
  %v434 = vlaneseq
  %v435 = vshrl.u32 %v434, 7
  %v436 = vsub.s32 0, %v435
  %v437 = vrot.slane %v99, %v436
  %v470 = vunpack.c.l.b16 %v66
  %v471 = vunpack.c.l.b16 %v67
  %v472 = vunpack.c.l.b16 %v68
  %v473 = vunpack.c.l.b16 %v69
  %v474 = vunpack.c.l.b16 %v70
  %v475 = vunpack.c.l.b16 %v71
  %v476 = vunpack.c.l.b16 %v72
  %v477 = vunpack.c.l.b16 %v73
  %v478 = vunpack.c.l.b16 %v74
  %v479 = vunpack.c.l.b16 %v75
  %v480 = vunpack.c.l.b16 %v76
  %v481 = vunpack.c.l.b16 %v77
  %v482 = vunpack.c.l.b16 %v78
  %v483 = vunpack.c.l.b16 %v79
  %v484 = vunpack.c.l.b16 %v80
  %v485 = vunpack.c.l.b16 %v81
  %v486 = vunpack.c.l.b16 %v82
  %v487 = vunpack.c.l.b16 %v83
  %v488 = vunpack.c.l.b16 %v84
  %v489 = vunpack.c.l.b16 %v85
  %v490 = vunpack.c.l.b16 %v86
  %v491 = vunpack.c.l.b16 %v87
  %v492 = vunpack.c.l.b16 %v88
  %v493 = vunpack.c.l.b16 %v89
  %v494 = vunpack.c.l.b16 %v90
  %v495 = vunpack.c.l.b16 %v91
  %v496 = vunpack.c.l.b16 %v92
  %v497 = vunpack.c.l.b16 %v93
  %v498 = vunpack.c.l.b16 %v94
  %v499 = vunpack.c.l.b16 %v95
  %v500 = vunpack.c.l.b16 %v96
  %v501 = vunpack.c.l.b16 %v97
  %v502 = vpack.c.b16 %v471, %v470
  %v503 = vpack.c.b16 %v473, %v472
  %v504 = vpack.c.b16 %v475, %v474
  %v505 = vpack.c.b16 %v477, %v476
  %v506 = vpack.c.b16 %v479, %v478
  %v507 = vpack.c.b16 %v481, %v480
  %v508 = vpack.c.b16 %v483, %v482
  %v509 = vpack.c.b16 %v485, %v484
  %v510 = vpack.c.b16 %v487, %v486
  %v511 = vpack.c.b16 %v489, %v488
  %v512 = vpack.c.b16 %v491, %v490
  %v513 = vpack.c.b16 %v493, %v492
  %v514 = vpack.c.b16 %v495, %v494
  %v515 = vpack.c.b16 %v497, %v496
  %v516 = vpack.c.b16 %v499, %v498
  %v517 = vpack.c.b16 %v501, %v500
  %534 = vmatprep.subr.bf16.mxu0 0
  %535 = vmatpush1.bf16.msra.mxu0 %v502
  %536 = vmatprep.subr.bf16.mxu0 0
  %537 = vmatpush1.bf16.msra.mxu0 %v503
  %538 = vmatprep.subr.bf16.mxu0 0
  %539 = vmatpush1.bf16.msra.mxu0 %v504
  %540 = vmatprep.subr.bf16.mxu0 0
  %541 = vmatpush1.bf16.msra.mxu0 %v505
  %542 = vmatprep.subr.bf16.mxu0 0
  %543 = vmatpush1.bf16.msra.mxu0 %v506
  %544 = vmatprep.subr.bf16.mxu0 0
  %545 = vmatpush1.bf16.msra.mxu0 %v507
  %546 = vmatprep.subr.bf16.mxu0 0
  %547 = vmatpush1.bf16.msra.mxu0 %v508
  %548 = vmatprep.subr.bf16.mxu0 0
  %549 = vmatpush1.bf16.msra.mxu0 %v509
  %550 = vmatprep.subr.bf16.mxu0 0
  %551 = vmatpush1.bf16.msra.mxu0 %v510
  %552 = vmatprep.subr.bf16.mxu0 0
  %553 = vmatpush1.bf16.msra.mxu0 %v511
  %554 = vmatprep.subr.bf16.mxu0 0
  %555 = vmatpush1.bf16.msra.mxu0 %v512
  %556 = vmatprep.subr.bf16.mxu0 0
  %557 = vmatpush1.bf16.msra.mxu0 %v513
  %558 = vmatprep.subr.bf16.mxu0 0
  %559 = vmatpush1.bf16.msra.mxu0 %v514
  %560 = vmatprep.subr.bf16.mxu0 0
  %561 = vmatpush1.bf16.msra.mxu0 %v515
  %562 = vmatprep.subr.bf16.mxu0 0
  %563 = vmatpush1.bf16.msra.mxu0 %v516
  %564 = vmatprep.subr.bf16.mxu0 0
  %565 = vmatpush1.bf16.msra.mxu0 %v517
  %566 = vmatprep.mubr.bf16.mxu0 %v100
  %567 = vmatmul.mubr.bf16.gmra.mrb[0].mxu0 %v426
  %v568 = vpop.f32.mrb[0].mxu0
  %v569 = vadd.f32 %v437, %v568
  %v570 = vpop.f32.mrb[0].mxu0
  %v571 = vpop.f32.mrb[0].mxu0
  %v572 = vadd.f32 %v437, %v571
  %v573 = vpop.f32.mrb[0].mxu0
  %574 = vmatprep.mubr.bf16.mxu0 %v101
  %575 = vmatmul.mubr.bf16.gmra.mrb[0].mxu0 %v427
  %v576 = vpop.f32.mrb[0].mxu0
  %v577 = vadd.f32 %v437, %v576
  %v578 = vpop.f32.mrb[0].mxu0
  %v579 = vpop.f32.mrb[0].mxu0
  %v580 = vadd.f32 %v437, %v579
  %v581 = vpop.f32.mrb[0].mxu0
  %582 = vmatprep.mubr.bf16.mxu0 %v102
  %583 = vmatmul.mubr.bf16.gmra.mrb[0].mxu0 %v428
  %v584 = vpop.f32.mrb[0].mxu0
  %v585 = vadd.f32 %v437, %v584
  %v586 = vpop.f32.mrb[0].mxu0
  %v587 = vpop.f32.mrb[0].mxu0
  %v588 = vadd.f32 %v437, %v587
  %v589 = vpop.f32.mrb[0].mxu0
  %590 = vmatprep.mubr.bf16.mxu0 %v103
  %591 = vmatmul.mubr.bf16.gmra.mrb[0].mxu0 %v429
  %v592 = vpop.f32.mrb[0].mxu0
  %v593 = vadd.f32 %v437, %v592
  %v594 = vpop.f32.mrb[0].mxu0
  %v595 = vpop.f32.mrb[0].mxu0
  %v596 = vadd.f32 %v437, %v595
  %v597 = vpop.f32.mrb[0].mxu0
  %598 = vmatprep.mubr.bf16.mxu0 %v104
  %599 = vmatmul.mubr.bf16.gmra.mrb[0].mxu0 %v430
  %v600 = vpop.f32.mrb[0].mxu0
  %v601 = vadd.f32 %v437, %v600
  %v602 = vpop.f32.mrb[0].mxu0
  %v603 = vpop.f32.mrb[0].mxu0
  %v604 = vadd.f32 %v437, %v603
  %v605 = vpop.f32.mrb[0].mxu0
  %606 = vmatprep.mubr.bf16.mxu0 %v105
  %607 = vmatmul.mubr.bf16.gmra.mrb[0].mxu0 %v431
  %v608 = vpop.f32.mrb[0].mxu0
  %v609 = vadd.f32 %v437, %v608
  %v610 = vpop.f32.mrb[0].mxu0
  %v611 = vpop.f32.mrb[0].mxu0
  %v612 = vadd.f32 %v437, %v611
  %v613 = vpop.f32.mrb[0].mxu0
  %614 = vmatprep.mubr.bf16.mxu0 %v106
  %615 = vmatmul.mubr.bf16.gmra.mrb[0].mxu0 %v432
  %v616 = vpop.f32.mrb[0].mxu0
  %v617 = vadd.f32 %v437, %v616
  %v618 = vpop.f32.mrb[0].mxu0
  %v619 = vpop.f32.mrb[0].mxu0
  %v620 = vadd.f32 %v437, %v619
  %v621 = vpop.f32.mrb[0].mxu0
  %622 = vmatprep.mubr.bf16.mxu0 %v107
  %623 = vmatmul.mubr.bf16.gmra.mrb[0].mxu0 %v433
  %v624 = vpop.f32.mrb[0].mxu0
  %v625 = vadd.f32 %v437, %v624
  %v626 = vpop.f32.mrb[0].mxu0
  %v627 = vpop.f32.mrb[0].mxu0
  %v628 = vadd.f32 %v437, %v627
  %v629 = vpop.f32.mrb[0].mxu0
  %630 = vdwg.mxu0
  %v631 = vmax.f32 %v569, 0.0
  %v632 = vmax.f32 %v572, 0.0
  %v633 = vmax.f32 %v577, 0.0
  %v634 = vmax.f32 %v580, 0.0
  %v635 = vmax.f32 %v585, 0.0
  %v636 = vmax.f32 %v588, 0.0
  %v637 = vmax.f32 %v593, 0.0
  %v638 = vmax.f32 %v596, 0.0
  %v639 = vmax.f32 %v601, 0.0
  %v640 = vmax.f32 %v604, 0.0
  %v641 = vmax.f32 %v609, 0.0
  %v642 = vmax.f32 %v612, 0.0
  %v643 = vmax.f32 %v617, 0.0
  %v644 = vmax.f32 %v620, 0.0
  %v645 = vmax.f32 %v625, 0.0
  %v646 = vmax.f32 %v628, 0.0
  %v647 = vld [vmem:[%s2 + $0xc0] sm:$0xf]
  %v648 = vld [vmem:[%s2 + $0xc4] sm:$0xf]
  %v649 = vld [vmem:[%s2 + $0xc8] sm:$0xf]
  %v650 = vld [vmem:[%s2 + $0xcc] sm:$0xf]
  %v651 = vld [vmem:[%s2 + $0xd0] sm:$0xf]
  %v652 = vld [vmem:[%s2 + $0xd4] sm:$0xf]
  %v653 = vld [vmem:[%s2 + $0xd8] sm:$0xf]
  %v654 = vld [vmem:[%s2 + $0xdc] sm:$0xf]
  %v655 = vld [vmem:[%s2 + $0xe0] sm:$0xf]
  %v656 = vld [vmem:[%s2 + $0xe4] sm:$0xf]
  %v657 = vld [vmem:[%s2 + $0xe8] sm:$0xf]
  %v658 = vld [vmem:[%s2 + $0xec] sm:$0xf]
  %v659 = vld [vmem:[%s2 + $0xf0] sm:$0xf]
  %v660 = vld [vmem:[%s2 + $0xf4] sm:$0xf]
  %v661 = vld [vmem:[%s2 + $0xf8] sm:$0xf]
  %v662 = vld [vmem:[%s2 + $0xfc] sm:$0xf]
  %v663 = vld [vmem:[%s2 + $0x100] sm:$0xf]
  %v664 = vld [vmem:[%s2 + $0x104] sm:$0xf]
  %v665 = vld [vmem:[%s2 + $0x108] sm:$0xf]
  %v666 = vld [vmem:[%s2 + $0x10c] sm:$0xf]
  %v667 = vld [vmem:[%s2 + $0x110] sm:$0xf]
  %v668 = vld [vmem:[%s2 + $0x114] sm:$0xf]
  %v669 = vld [vmem:[%s2 + $0x118] sm:$0xf]
  %v670 = vld [vmem:[%s2 + $0x11c] sm:$0xf]
  %v671 = vld [vmem:[%s2 + $0x120] sm:$0xf]
  %v672 = vld [vmem:[%s2 + $0x124] sm:$0xf]
  %v673 = vld [vmem:[%s2 + $0x128] sm:$0xf]
  %v674 = vld [vmem:[%s2 + $0x12c] sm:$0xf]
  %v675 = vld [vmem:[%s2 + $0x130] sm:$0xf]
  %v676 = vld [vmem:[%s2 + $0x134] sm:$0xf]
  %v677 = vld [vmem:[%s2 + $0x138] sm:$0xf]
  %v678 = vld [vmem:[%s2 + $0x13c] sm:$0xf]
  %v679 = vld [vmem:[%s2 + $0x140] sm:$0xf]
  %v680 = vld [vmem:[%s2 + $0x144] sm:$0xf]
  %v681 = vld [vmem:[%s2 + $0x148] sm:$0xf]
  %v682 = vld [vmem:[%s2 + $0x14c] sm:$0xf]
  %v683 = vld [vmem:[%s2 + $0x150] sm:$0xf]
  %v684 = vld [vmem:[%s2 + $0x154] sm:$0xf]
  %v685 = vld [vmem:[%s2 + $0x158] sm:$0xf]
  %v686 = vld [vmem:[%s2 + $0x15c] sm:$0xf]
  %v687 = vld [vmem:[%s2 + $0x160] sm:$0xf]
  %v688 = vld [vmem:[%s2 + $0x164] sm:$0xf]
  %v689 = vld [vmem:[%s2 + $0x168] sm:$0xf]
  %v690 = vld [vmem:[%s2 + $0x16c] sm:$0xf]
  %v691 = vld [vmem:[%s2 + $0x170] sm:$0xf]
  %v692 = vld [vmem:[%s2 + $0x174] sm:$0xf]
  %v693 = vld [vmem:[%s2 + $0x178] sm:$0xf]
  %v694 = vld [vmem:[%s2 + $0x17c] sm:$0xf]
  %v695 = vld [vmem:[%s3 + $0x2] sm:$0x1]
  %v696 = vld [vmem:[%s3 + $0x3] sm:$0x1]
  %v697 = vpack.c.bf16 %v632, %v631
  %v698 = vpack.c.bf16 %v634, %v633
  %v699 = vpack.c.bf16 %v636, %v635
  %v700 = vpack.c.bf16 %v638, %v637
  %v701 = vpack.c.bf16 %v640, %v639
  %v702 = vpack.c.bf16 %v642, %v641
  %v703 = vpack.c.bf16 %v644, %v643
  %v704 = vpack.c.bf16 %v646, %v645
  %v705 = vlaneseq
  %v706 = vshrl.u32 %v705, 7
  %v707 = vsub.s32 0, %v706
  %v708 = vrot.slane %v695, %v707
  %v725 = vunpack.c.l.b16 %v647
  %v726 = vunpack.c.l.b16 %v648
  %v727 = vunpack.c.l.b16 %v649
  %v728 = vunpack.c.l.b16 %v650
  %v729 = vunpack.c.l.b16 %v651
  %v730 = vunpack.c.l.b16 %v652
  %v731 = vunpack.c.l.b16 %v653
  %v732 = vunpack.c.l.b16 %v654
  %v733 = vunpack.c.l.b16 %v655
  %v734 = vunpack.c.l.b16 %v656
  %v735 = vunpack.c.l.b16 %v657
  %v736 = vunpack.c.l.b16 %v658
  %v737 = vunpack.c.l.b16 %v659
  %v738 = vunpack.c.l.b16 %v660
  %v739 = vunpack.c.l.b16 %v661
  %v740 = vunpack.c.l.b16 %v662
  %v741 = vpack.c.b16 %v726, %v725
  %v742 = vpack.c.b16 %v728, %v727
  %v743 = vpack.c.b16 %v730, %v729
  %v744 = vpack.c.b16 %v732, %v731
  %v745 = vpack.c.b16 %v734, %v733
  %v746 = vpack.c.b16 %v736, %v735
  %v747 = vpack.c.b16 %v738, %v737
  %v748 = vpack.c.b16 %v740, %v739
  %757 = vmatprep.subr.bf16.mxu0 0
  %758 = vmatpush1.bf16.msra.mxu0 %v741
  %759 = vmatprep.subr.bf16.mxu0 0
  %760 = vmatpush1.bf16.msra.mxu0 %v742
  %761 = vmatprep.subr.bf16.mxu0 0
  %762 = vmatpush1.bf16.msra.mxu0 %v743
  %763 = vmatprep.subr.bf16.mxu0 0
  %764 = vmatpush1.bf16.msra.mxu0 %v744
  %765 = vmatprep.subr.bf16.mxu0 0
  %766 = vmatpush1.bf16.msra.mxu0 %v745
  %767 = vmatprep.subr.bf16.mxu0 0
  %768 = vmatpush1.bf16.msra.mxu0 %v746
  %769 = vmatprep.subr.bf16.mxu0 0
  %770 = vmatpush1.bf16.msra.mxu0 %v747
  %771 = vmatprep.subr.bf16.mxu0 0
  %772 = vmatpush1.bf16.msra.mxu0 %v748
  %773 = vmatprep.subr.bf16.mxu0 0
  %774 = vmatpush1.bf16.msra.mxu0 0
  %775 = vmatprep.subr.bf16.mxu0 0
  %776 = vmatpush1.bf16.msra.mxu0 0
  %777 = vmatprep.subr.bf16.mxu0 0
  %778 = vmatpush1.bf16.msra.mxu0 0
  %779 = vmatprep.subr.bf16.mxu0 0
  %780 = vmatpush1.bf16.msra.mxu0 0
  %781 = vmatprep.subr.bf16.mxu0 0
  %782 = vmatpush1.bf16.msra.mxu0 0
  %783 = vmatprep.subr.bf16.mxu0 0
  %784 = vmatpush1.bf16.msra.mxu0 0
  %785 = vmatprep.subr.bf16.mxu0 0
  %786 = vmatpush1.bf16.msra.mxu0 0
  %787 = vmatprep.subr.bf16.mxu0 0
  %788 = vmatpush1.bf16.msra.mxu0 0
  %789 = vmatprep.mubr.bf16.mxu0 0
  %790 = vmatmul.mubr.bf16.gmra.mrb[0].mxu0 %v697
  %v791 = vpop.f32.mrb[0].mxu0
  %v792 = vadd.f32 %v708, %v791
  %v793 = vpop.f32.mrb[0].mxu0
  %v794 = vpop.f32.mrb[0].mxu0
  %v795 = vadd.f32 %v708, %v794
  %v796 = vpop.f32.mrb[0].mxu0
  %797 = vmatprep.mubr.bf16.mxu0 0
  %798 = vmatmul.mubr.bf16.gmra.mrb[0].mxu0 %v698
  %v799 = vpop.f32.mrb[0].mxu0
  %v800 = vadd.f32 %v708, %v799
  %v801 = vpop.f32.mrb[0].mxu0
  %v802 = vpop.f32.mrb[0].mxu0
  %v803 = vadd.f32 %v708, %v802
  %v804 = vpop.f32.mrb[0].mxu0
  %805 = vmatprep.mubr.bf16.mxu0 0
  %806 = vmatmul.mubr.bf16.gmra.mrb[0].mxu0 %v699
  %v807 = vpop.f32.mrb[0].mxu0
  %v808 = vadd.f32 %v708, %v807
  %v809 = vpop.f32.mrb[0].mxu0
  %v810 = vpop.f32.mrb[0].mxu0
  %v811 = vadd.f32 %v708, %v810
  %v812 = vpop.f32.mrb[0].mxu0
  %813 = vmatprep.mubr.bf16.mxu0 0
  %814 = vmatmul.mubr.bf16.gmra.mrb[0].mxu0 %v700
  %v815 = vpop.f32.mrb[0].mxu0
  %v816 = vadd.f32 %v708, %v815
  %v817 = vpop.f32.mrb[0].mxu0
  %v818 = vpop.f32.mrb[0].mxu0
  %v819 = vadd.f32 %v708, %v818
  %v820 = vpop.f32.mrb[0].mxu0
  %821 = vmatprep.mubr.bf16.mxu0 0
  %822 = vmatmul.mubr.bf16.gmra.mrb[0].mxu0 %v701
  %v823 = vpop.f32.mrb[0].mxu0
  %v824 = vadd.f32 %v708, %v823
  %v825 = vpop.f32.mrb[0].mxu0
  %v826 = vpop.f32.mrb[0].mxu0
  %v827 = vadd.f32 %v708, %v826
  %v828 = vpop.f32.mrb[0].mxu0
  %829 = vmatprep.mubr.bf16.mxu0 0
  %830 = vmatmul.mubr.bf16.gmra.mrb[0].mxu0 %v702
  %v831 = vpop.f32.mrb[0].mxu0
  %v832 = vadd.f32 %v708, %v831
  %v833 = vpop.f32.mrb[0].mxu0
  %v834 = vpop.f32.mrb[0].mxu0
  %v835 = vadd.f32 %v708, %v834
  %v836 = vpop.f32.mrb[0].mxu0
  %837 = vmatprep.mubr.bf16.mxu0 0
  %838 = vmatmul.mubr.bf16.gmra.mrb[0].mxu0 %v703
  %v839 = vpop.f32.mrb[0].mxu0
  %v840 = vadd.f32 %v708, %v839
  %v841 = vpop.f32.mrb[0].mxu0
  %v842 = vpop.f32.mrb[0].mxu0
  %v843 = vadd.f32 %v708, %v842
  %v844 = vpop.f32.mrb[0].mxu0
  %845 = vmatprep.mubr.bf16.mxu0 0
  %846 = vmatmul.mubr.bf16.gmra.mrb[0].mxu0 %v704
  %v847 = vpop.f32.mrb[0].mxu0
  %v848 = vadd.f32 %v708, %v847
  %v849 = vpop.f32.mrb[0].mxu0
  %v850 = vpop.f32.mrb[0].mxu0
  %v851 = vadd.f32 %v708, %v850
  %v852 = vpop.f32.mrb[0].mxu0
  %853 = vdwg.mxu0
  %v854 = vmax.f32 %v792, 0.0
  %v855 = vmax.f32 %v795, 0.0
  %v856 = vmax.f32 %v800, 0.0
  %v857 = vmax.f32 %v803, 0.0
  %v858 = vmax.f32 %v808, 0.0
  %v859 = vmax.f32 %v811, 0.0
  %v860 = vmax.f32 %v816, 0.0
  %v861 = vmax.f32 %v819, 0.0
  %v862 = vmax.f32 %v824, 0.0
  %v863 = vmax.f32 %v827, 0.0
  %v864 = vmax.f32 %v832, 0.0
  %v865 = vmax.f32 %v835, 0.0
  %v866 = vmax.f32 %v840, 0.0
  %v867 = vmax.f32 %v843, 0.0
  %v868 = vmax.f32 %v848, 0.0
  %v869 = vmax.f32 %v851, 0.0
  %v870 = vpack.c.bf16 %v855, %v854
  %v871 = vpack.c.bf16 %v857, %v856
  %v872 = vpack.c.bf16 %v859, %v858
  %v873 = vpack.c.bf16 %v861, %v860
  %v874 = vpack.c.bf16 %v863, %v862
  %v875 = vpack.c.bf16 %v865, %v864
  %v876 = vpack.c.bf16 %v867, %v866
  %v877 = vpack.c.bf16 %v869, %v868
  %878 = vmatprep.subr.bf16.mxu0 0
  %879 = vmatpush1.bf16.msra.mxu0 %v870
  %880 = vmatprep.subr.bf16.mxu0 0
  %881 = vmatpush1.bf16.msra.mxu0 %v871
  %882 = vmatprep.subr.bf16.mxu0 0
  %883 = vmatpush1.bf16.msra.mxu0 %v872
  %884 = vmatprep.subr.bf16.mxu0 0
  %885 = vmatpush1.bf16.msra.mxu0 %v873
  %886 = vmatprep.subr.bf16.mxu0 0
  %887 = vmatpush1.bf16.msra.mxu0 %v874
  %888 = vmatprep.subr.bf16.mxu0 0
  %889 = vmatpush1.bf16.msra.mxu0 %v875
  %890 = vmatprep.subr.bf16.mxu0 0
  %891 = vmatpush1.bf16.msra.mxu0 %v876
  %892 = vmatprep.subr.bf16.mxu0 0
  %893 = vmatpush1.bf16.msra.mxu0 %v877
  %894 = vmatprep.subr.bf16.mxu0 0
  %895 = vmatpush1.bf16.msra.mxu0 0
  %896 = vmatprep.subr.bf16.mxu0 0
  %897 = vmatpush1.bf16.msra.mxu0 0
  %898 = vmatprep.subr.bf16.mxu0 0
  %899 = vmatpush1.bf16.msra.mxu0 0
  %900 = vmatprep.subr.bf16.mxu0 0
  %901 = vmatpush1.bf16.msra.mxu0 0
  %902 = vmatprep.subr.bf16.mxu0 0
  %903 = vmatpush1.bf16.msra.mxu0 0
  %904 = vmatprep.subr.bf16.mxu0 0
  %905 = vmatpush1.bf16.msra.mxu0 0
  %906 = vmatprep.subr.bf16.mxu0 0
  %907 = vmatpush1.bf16.msra.mxu0 0
  %908 = vmatprep.subr.bf16.mxu0 0
  %909 = vmatpush1.bf16.msra.mxu0 0
  %910 = vmatprep.mubr.bf16.mxu0 0
  %911 = vmatmul.mubr.bf16.gmra.mrb[0].mxu0 %v313
  %v912 = vpop.f32.mrb[0].mxu0
  %v913 = vadd.f32 0.0, %v912
  %v914 = vpop.f32.mrb[0].mxu0
  %v915 = vpop.f32.mrb[0].mxu0
  %v916 = vadd.f32 0.0, %v915
  %v917 = vpop.f32.mrb[0].mxu0
  %918 = vmatprep.mubr.bf16.mxu0 0
  %919 = vmatmul.mubr.bf16.gmra.mrb[0].mxu0 %v314
  %v920 = vpop.f32.mrb[0].mxu0
  %v921 = vadd.f32 0.0, %v920
  %v922 = vpop.f32.mrb[0].mxu0
  %v923 = vpop.f32.mrb[0].mxu0
  %v924 = vadd.f32 0.0, %v923
  %v925 = vpop.f32.mrb[0].mxu0
  %926 = vmatprep.mubr.bf16.mxu0 0
  %927 = vmatmul.mubr.bf16.gmra.mrb[0].mxu0 %v315
  %v928 = vpop.f32.mrb[0].mxu0
  %v929 = vadd.f32 0.0, %v928
  %v930 = vpop.f32.mrb[0].mxu0
  %v931 = vpop.f32.mrb[0].mxu0
  %v932 = vadd.f32 0.0, %v931
  %v933 = vpop.f32.mrb[0].mxu0
  %934 = vmatprep.mubr.bf16.mxu0 0
  %935 = vmatmul.mubr.bf16.gmra.mrb[0].mxu0 %v316
  %v936 = vpop.f32.mrb[0].mxu0
  %v937 = vadd.f32 0.0, %v936
  %v938 = vpop.f32.mrb[0].mxu0
  %v939 = vpop.f32.mrb[0].mxu0
  %v940 = vadd.f32 0.0, %v939
  %v941 = vpop.f32.mrb[0].mxu0
  %942 = vmatprep.mubr.bf16.mxu0 0
  %943 = vmatmul.mubr.bf16.gmra.mrb[0].mxu0 %v317
  %v944 = vpop.f32.mrb[0].mxu0
  %v945 = vadd.f32 0.0, %v944
  %v946 = vpop.f32.mrb[0].mxu0
  %v947 = vpop.f32.mrb[0].mxu0
  %v948 = vadd.f32 0.0, %v947
  %v949 = vpop.f32.mrb[0].mxu0
  %950 = vmatprep.mubr.bf16.mxu0 0
  %951 = vmatmul.mubr.bf16.gmra.mrb[0].mxu0 %v318
  %v952 = vpop.f32.mrb[0].mxu0
  %v953 = vadd.f32 0.0, %v952
  %v954 = vpop.f32.mrb[0].mxu0
  %v955 = vpop.f32.mrb[0].mxu0
  %v956 = vadd.f32 0.0, %v955
  %v957 = vpop.f32.mrb[0].mxu0
  %958 = vmatprep.mubr.bf16.mxu0 0
  %959 = vmatmul.mubr.bf16.gmra.mrb[0].mxu0 %v319
  %v960 = vpop.f32.mrb[0].mxu0
  %v961 = vadd.f32 0.0, %v960
  %v962 = vpop.f32.mrb[0].mxu0
  %v963 = vpop.f32.mrb[0].mxu0
  %v964 = vadd.f32 0.0, %v963
  %v965 = vpop.f32.mrb[0].mxu0
  %966 = vmatprep.mubr.bf16.mxu0 0
  %967 = vmatmul.mubr.bf16.gmra.mrb[0].mxu0 %v320
  %v968 = vpop.f32.mrb[0].mxu0
  %v969 = vadd.f32 0.0, %v968
  %v970 = vpop.f32.mrb[0].mxu0
  %v971 = vpop.f32.mrb[0].mxu0
  %v972 = vadd.f32 0.0, %v971
  %v973 = vpop.f32.mrb[0].mxu0
  %974 = vdwg.mxu0
  %v975 = vpack.c.bf16 %v916, %v913
  %v976 = vpack.c.bf16 %v924, %v921
  %v977 = vpack.c.bf16 %v932, %v929
  %v978 = vpack.c.bf16 %v940, %v937
  %v979 = vpack.c.bf16 %v948, %v945
  %v980 = vpack.c.bf16 %v956, %v953
  %v981 = vpack.c.bf16 %v964, %v961
  %v982 = vpack.c.bf16 %v972, %v969
  %v983 = vlaneseq
  %v984 = vshrl.u32 %v983, 7
  %v985 = vsub.s32 0, %v984
  %v986 = vrot.slane %v696, %v985
  %v1019 = vunpack.c.l.b16 %v663
  %v1020 = vunpack.c.l.b16 %v664
  %v1021 = vunpack.c.l.b16 %v665
  %v1022 = vunpack.c.l.b16 %v666
  %v1023 = vunpack.c.l.b16 %v667
  %v1024 = vunpack.c.l.b16 %v668
  %v1025 = vunpack.c.l.b16 %v669
  %v1026 = vunpack.c.l.b16 %v670
  %v1027 = vunpack.c.l.b16 %v671
  %v1028 = vunpack.c.l.b16 %v672
  %v1029 = vunpack.c.l.b16 %v673
  %v1030 = vunpack.c.l.b16 %v674
  %v1031 = vunpack.c.l.b16 %v675
  %v1032 = vunpack.c.l.b16 %v676
  %v1033 = vunpack.c.l.b16 %v677
  %v1034 = vunpack.c.l.b16 %v678
  %v1035 = vunpack.c.l.b16 %v679
  %v1036 = vunpack.c.l.b16 %v680
  %v1037 = vunpack.c.l.b16 %v681
  %v1038 = vunpack.c.l.b16 %v682
  %v1039 = vunpack.c.l.b16 %v683
  %v1040 = vunpack.c.l.b16 %v684
  %v1041 = vunpack.c.l.b16 %v685
  %v1042 = vunpack.c.l.b16 %v686
  %v1043 = vunpack.c.l.b16 %v687
  %v1044 = vunpack.c.l.b16 %v688
  %v1045 = vunpack.c.l.b16 %v689
  %v1046 = vunpack.c.l.b16 %v690
  %v1047 = vunpack.c.l.b16 %v691
  %v1048 = vunpack.c.l.b16 %v692
  %v1049 = vunpack.c.l.b16 %v693
  %v1050 = vunpack.c.l.b16 %v694
  %v1051 = vpack.c.b16 %v1020, %v1019
  %v1052 = vpack.c.b16 %v1022, %v1021
  %v1053 = vpack.c.b16 %v1024, %v1023
  %v1054 = vpack.c.b16 %v1026, %v1025
  %v1055 = vpack.c.b16 %v1028, %v1027
  %v1056 = vpack.c.b16 %v1030, %v1029
  %v1057 = vpack.c.b16 %v1032, %v1031
  %v1058 = vpack.c.b16 %v1034, %v1033
  %v1059 = vpack.c.b16 %v1036, %v1035
  %v1060 = vpack.c.b16 %v1038, %v1037
  %v1061 = vpack.c.b16 %v1040, %v1039
  %v1062 = vpack.c.b16 %v1042, %v1041
  %v1063 = vpack.c.b16 %v1044, %v1043
  %v1064 = vpack.c.b16 %v1046, %v1045
  %v1065 = vpack.c.b16 %v1048, %v1047
  %v1066 = vpack.c.b16 %v1050, %v1049
  %1083 = vmatprep.subr.bf16.mxu0 0
  %1084 = vmatpush1.bf16.msra.mxu0 %v1051
  %1085 = vmatprep.subr.bf16.mxu0 0
  %1086 = vmatpush1.bf16.msra.mxu0 %v1052
  %1087 = vmatprep.subr.bf16.mxu0 0
  %1088 = vmatpush1.bf16.msra.mxu0 %v1053
  %1089 = vmatprep.subr.bf16.mxu0 0
  %1090 = vmatpush1.bf16.msra.mxu0 %v1054
  %1091 = vmatprep.subr.bf16.mxu0 0
  %1092 = vmatpush1.bf16.msra.mxu0 %v1055
  %1093 = vmatprep.subr.bf16.mxu0 0
  %1094 = vmatpush1.bf16.msra.mxu0 %v1056
  %1095 = vmatprep.subr.bf16.mxu0 0
  %1096 = vmatpush1.bf16.msra.mxu0 %v1057
  %1097 = vmatprep.subr.bf16.mxu0 0
  %1098 = vmatpush1.bf16.msra.mxu0 %v1058
  %1099 = vmatprep.subr.bf16.mxu0 0
  %1100 = vmatpush1.bf16.msra.mxu0 %v1059
  %1101 = vmatprep.subr.bf16.mxu0 0
  %1102 = vmatpush1.bf16.msra.mxu0 %v1060
  %1103 = vmatprep.subr.bf16.mxu0 0
  %1104 = vmatpush1.bf16.msra.mxu0 %v1061
  %1105 = vmatprep.subr.bf16.mxu0 0
  %1106 = vmatpush1.bf16.msra.mxu0 %v1062
  %1107 = vmatprep.subr.bf16.mxu0 0
  %1108 = vmatpush1.bf16.msra.mxu0 %v1063
  %1109 = vmatprep.subr.bf16.mxu0 0
  %1110 = vmatpush1.bf16.msra.mxu0 %v1064
  %1111 = vmatprep.subr.bf16.mxu0 0
  %1112 = vmatpush1.bf16.msra.mxu0 %v1065
  %1113 = vmatprep.subr.bf16.mxu0 0
  %1114 = vmatpush1.bf16.msra.mxu0 %v1066
  %1115 = vmatprep.mubr.bf16.mxu0 %v697
  %1116 = vmatmul.mubr.bf16.gmra.mrb[0].mxu0 %v975
  %v1117 = vpop.f32.mrb[0].mxu0
  %v1118 = vadd.f32 %v986, %v1117
  %v1119 = vpop.f32.mrb[0].mxu0
  %v1120 = vpop.f32.mrb[0].mxu0
  %v1121 = vadd.f32 %v986, %v1120
  %v1122 = vpop.f32.mrb[0].mxu0
  %1123 = vmatprep.mubr.bf16.mxu0 %v698
  %1124 = vmatmul.mubr.bf16.gmra.mrb[0].mxu0 %v976
  %v1125 = vpop.f32.mrb[0].mxu0
  %v1126 = vadd.f32 %v986, %v1125
  %v1127 = vpop.f32.mrb[0].mxu0
  %v1128 = vpop.f32.mrb[0].mxu0
  %v1129 = vadd.f32 %v986, %v1128
  %v1130 = vpop.f32.mrb[0].mxu0
  %1131 = vmatprep.mubr.bf16.mxu0 %v699
  %1132 = vmatmul.mubr.bf16.gmra.mrb[0].mxu0 %v977
  %v1133 = vpop.f32.mrb[0].mxu0
  %v1134 = vadd.f32 %v986, %v1133
  %v1135 = vpop.f32.mrb[0].mxu0
  %v1136 = vpop.f32.mrb[0].mxu0
  %v1137 = vadd.f32 %v986, %v1136
  %v1138 = vpop.f32.mrb[0].mxu0
  %1139 = vmatprep.mubr.bf16.mxu0 %v700
  %1140 = vmatmul.mubr.bf16.gmra.mrb[0].mxu0 %v978
  %v1141 = vpop.f32.mrb[0].mxu0
  %v1142 = vadd.f32 %v986, %v1141
  %v1143 = vpop.f32.mrb[0].mxu0
  %v1144 = vpop.f32.mrb[0].mxu0
  %v1145 = vadd.f32 %v986, %v1144
  %v1146 = vpop.f32.mrb[0].mxu0
  %1147 = vmatprep.mubr.bf16.mxu0 %v701
  %1148 = vmatmul.mubr.bf16.gmra.mrb[0].mxu0 %v979
  %v1149 = vpop.f32.mrb[0].mxu0
  %v1150 = vadd.f32 %v986, %v1149
  %v1151 = vpop.f32.mrb[0].mxu0
  %v1152 = vpop.f32.mrb[0].mxu0
  %v1153 = vadd.f32 %v986, %v1152
  %v1154 = vpop.f32.mrb[0].mxu0
  %1155 = vmatprep.mubr.bf16.mxu0 %v702
  %1156 = vmatmul.mubr.bf16.gmra.mrb[0].mxu0 %v980
  %v1157 = vpop.f32.mrb[0].mxu0
  %v1158 = vadd.f32 %v986, %v1157
  %v1159 = vpop.f32.mrb[0].mxu0
  %v1160 = vpop.f32.mrb[0].mxu0
  %v1161 = vadd.f32 %v986, %v1160
  %v1162 = vpop.f32.mrb[0].mxu0
  %1163 = vmatprep.mubr.bf16.mxu0 %v703
  %1164 = vmatmul.mubr.bf16.gmra.mrb[0].mxu0 %v981
  %v1165 = vpop.f32.mrb[0].mxu0
  %v1166 = vadd.f32 %v986, %v1165
  %v1167 = vpop.f32.mrb[0].mxu0
  %v1168 = vpop.f32.mrb[0].mxu0
  %v1169 = vadd.f32 %v986, %v1168
  %v1170 = vpop.f32.mrb[0].mxu0
  %1171 = vmatprep.mubr.bf16.mxu0 %v704
  %1172 = vmatmul.mubr.bf16.gmra.mrb[0].mxu0 %v982
  %v1173 = vpop.f32.mrb[0].mxu0
  %v1174 = vadd.f32 %v986, %v1173
  %v1175 = vpop.f32.mrb[0].mxu0
  %v1176 = vpop.f32.mrb[0].mxu0
  %v1177 = vadd.f32 %v986, %v1176
  %v1178 = vpop.f32.mrb[0].mxu0
  %1179 = vdwg.mxu0
  %v1180 = vmax.f32 %v1118, 0.0
  %v1181 = vmax.f32 %v1121, 0.0
  %v1182 = vmax.f32 %v1126, 0.0
  %v1183 = vmax.f32 %v1129, 0.0
  %v1184 = vmax.f32 %v1134, 0.0
  %v1185 = vmax.f32 %v1137, 0.0
  %v1186 = vmax.f32 %v1142, 0.0
  %v1187 = vmax.f32 %v1145, 0.0
  %v1188 = vmax.f32 %v1150, 0.0
  %v1189 = vmax.f32 %v1153, 0.0
  %v1190 = vmax.f32 %v1158, 0.0
  %v1191 = vmax.f32 %v1161, 0.0
  %v1192 = vmax.f32 %v1166, 0.0
  %v1193 = vmax.f32 %v1169, 0.0
  %v1194 = vmax.f32 %v1174, 0.0
  %v1195 = vmax.f32 %v1177, 0.0
  %v1196 = vld [vmem:[%s2 + $0x180] sm:$0xf]
  %v1197 = vld [vmem:[%s2 + $0x184] sm:$0xf]
  %v1198 = vld [vmem:[%s2 + $0x188] sm:$0xf]
  %v1199 = vld [vmem:[%s2 + $0x18c] sm:$0xf]
  %v1200 = vld [vmem:[%s2 + $0x190] sm:$0xf]
  %v1201 = vld [vmem:[%s2 + $0x194] sm:$0xf]
  %v1202 = vld [vmem:[%s2 + $0x198] sm:$0xf]
  %v1203 = vld [vmem:[%s2 + $0x19c] sm:$0xf]
  %v1204 = vld [vmem:[%s2 + $0x1a0] sm:$0xf]
  %v1205 = vld [vmem:[%s2 + $0x1a4] sm:$0xf]
  %v1206 = vld [vmem:[%s2 + $0x1a8] sm:$0xf]
  %v1207 = vld [vmem:[%s2 + $0x1ac] sm:$0xf]
  %v1208 = vld [vmem:[%s2 + $0x1b0] sm:$0xf]
  %v1209 = vld [vmem:[%s2 + $0x1b4] sm:$0xf]
  %v1210 = vld [vmem:[%s2 + $0x1b8] sm:$0xf]
  %v1211 = vld [vmem:[%s2 + $0x1bc] sm:$0xf]
  %v1212 = vld [vmem:[%s2 + $0x1c0] sm:$0xf]
  %v1213 = vld [vmem:[%s2 + $0x1c4] sm:$0xf]
  %v1214 = vld [vmem:[%s2 + $0x1c8] sm:$0xf]
  %v1215 = vld [vmem:[%s2 + $0x1cc] sm:$0xf]
  %v1216 = vld [vmem:[%s2 + $0x1d0] sm:$0xf]
  %v1217 = vld [vmem:[%s2 + $0x1d4] sm:$0xf]
  %v1218 = vld [vmem:[%s2 + $0x1d8] sm:$0xf]
  %v1219 = vld [vmem:[%s2 + $0x1dc] sm:$0xf]
  %v1220 = vld [vmem:[%s2 + $0x1e0] sm:$0xf]
  %v1221 = vld [vmem:[%s2 + $0x1e4] sm:$0xf]
  %v1222 = vld [vmem:[%s2 + $0x1e8] sm:$0xf]
  %v1223 = vld [vmem:[%s2 + $0x1ec] sm:$0xf]
  %v1224 = vld [vmem:[%s2 + $0x1f0] sm:$0xf]
  %v1225 = vld [vmem:[%s2 + $0x1f4] sm:$0xf]
  %v1226 = vld [vmem:[%s2 + $0x1f8] sm:$0xf]
  %v1227 = vld [vmem:[%s2 + $0x1fc] sm:$0xf]
  %v1228 = vld [vmem:[%s2 + $0x200] sm:$0xf]
  %v1229 = vld [vmem:[%s2 + $0x204] sm:$0xf]
  %v1230 = vld [vmem:[%s2 + $0x208] sm:$0xf]
  %v1231 = vld [vmem:[%s2 + $0x20c] sm:$0xf]
  %v1232 = vld [vmem:[%s2 + $0x210] sm:$0xf]
  %v1233 = vld [vmem:[%s2 + $0x214] sm:$0xf]
  %v1234 = vld [vmem:[%s2 + $0x218] sm:$0xf]
  %v1235 = vld [vmem:[%s2 + $0x21c] sm:$0xf]
  %v1236 = vld [vmem:[%s2 + $0x220] sm:$0xf]
  %v1237 = vld [vmem:[%s2 + $0x224] sm:$0xf]
  %v1238 = vld [vmem:[%s2 + $0x228] sm:$0xf]
  %v1239 = vld [vmem:[%s2 + $0x22c] sm:$0xf]
  %v1240 = vld [vmem:[%s2 + $0x230] sm:$0xf]
  %v1241 = vld [vmem:[%s2 + $0x234] sm:$0xf]
  %v1242 = vld [vmem:[%s2 + $0x238] sm:$0xf]
  %v1243 = vld [vmem:[%s2 + $0x23c] sm:$0xf]
  %v1244 = vld [vmem:[%s3 + $0x4] sm:$0x1]
  %v1245 = vld [vmem:[%s3 + $0x5] sm:$0x1]
  %v1246 = vpack.c.bf16 %v1181, %v1180
  %v1247 = vpack.c.bf16 %v1183, %v1182
  %v1248 = vpack.c.bf16 %v1185, %v1184
  %v1249 = vpack.c.bf16 %v1187, %v1186
  %v1250 = vpack.c.bf16 %v1189, %v1188
  %v1251 = vpack.c.bf16 %v1191, %v1190
  %v1252 = vpack.c.bf16 %v1193, %v1192
  %v1253 = vpack.c.bf16 %v1195, %v1194
  %v1254 = vlaneseq
  %v1255 = vshrl.u32 %v1254, 7
  %v1256 = vsub.s32 0, %v1255
  %v1257 = vrot.slane %v1244, %v1256
  %v1274 = vunpack.c.l.b16 %v1196
  %v1275 = vunpack.c.l.b16 %v1197
  %v1276 = vunpack.c.l.b16 %v1198
  %v1277 = vunpack.c.l.b16 %v1199
  %v1278 = vunpack.c.l.b16 %v1200
  %v1279 = vunpack.c.l.b16 %v1201
  %v1280 = vunpack.c.l.b16 %v1202
  %v1281 = vunpack.c.l.b16 %v1203
  %v1282 = vunpack.c.l.b16 %v1204
  %v1283 = vunpack.c.l.b16 %v1205
  %v1284 = vunpack.c.l.b16 %v1206
  %v1285 = vunpack.c.l.b16 %v1207
  %v1286 = vunpack.c.l.b16 %v1208
  %v1287 = vunpack.c.l.b16 %v1209
  %v1288 = vunpack.c.l.b16 %v1210
  %v1289 = vunpack.c.l.b16 %v1211
  %v1290 = vpack.c.b16 %v1275, %v1274
  %v1291 = vpack.c.b16 %v1277, %v1276
  %v1292 = vpack.c.b16 %v1279, %v1278
  %v1293 = vpack.c.b16 %v1281, %v1280
  %v1294 = vpack.c.b16 %v1283, %v1282
  %v1295 = vpack.c.b16 %v1285, %v1284
  %v1296 = vpack.c.b16 %v1287, %v1286
  %v1297 = vpack.c.b16 %v1289, %v1288
  %1306 = vmatprep.subr.bf16.mxu0 0
  %1307 = vmatpush1.bf16.msra.mxu0 %v1290
  %1308 = vmatprep.subr.bf16.mxu0 0
  %1309 = vmatpush1.bf16.msra.mxu0 %v1291
  %1310 = vmatprep.subr.bf16.mxu0 0
  %1311 = vmatpush1.bf16.msra.mxu0 %v1292
  %1312 = vmatprep.subr.bf16.mxu0 0
  %1313 = vmatpush1.bf16.msra.mxu0 %v1293
  %1314 = vmatprep.subr.bf16.mxu0 0
  %1315 = vmatpush1.bf16.msra.mxu0 %v1294
  %1316 = vmatprep.subr.bf16.mxu0 0
  %1317 = vmatpush1.bf16.msra.mxu0 %v1295
  %1318 = vmatprep.subr.bf16.mxu0 0
  %1319 = vmatpush1.bf16.msra.mxu0 %v1296
  %1320 = vmatprep.subr.bf16.mxu0 0
  %1321 = vmatpush1.bf16.msra.mxu0 %v1297
  %1322 = vmatprep.subr.bf16.mxu0 0
  %1323 = vmatpush1.bf16.msra.mxu0 0
  %1324 = vmatprep.subr.bf16.mxu0 0
  %1325 = vmatpush1.bf16.msra.mxu0 0
  %1326 = vmatprep.subr.bf16.mxu0 0
  %1327 = vmatpush1.bf16.msra.mxu0 0
  %1328 = vmatprep.subr.bf16.mxu0 0
  %1329 = vmatpush1.bf16.msra.mxu0 0
  %1330 = vmatprep.subr.bf16.mxu0 0
  %1331 = vmatpush1.bf16.msra.mxu0 0
  %1332 = vmatprep.subr.bf16.mxu0 0
  %1333 = vmatpush1.bf16.msra.mxu0 0
  %1334 = vmatprep.subr.bf16.mxu0 0
  %1335 = vmatpush1.bf16.msra.mxu0 0
  %1336 = vmatprep.subr.bf16.mxu0 0
  %1337 = vmatpush1.bf16.msra.mxu0 0
  %1338 = vmatprep.mubr.bf16.mxu0 0
  %1339 = vmatmul.mubr.bf16.gmra.mrb[0].mxu0 %v1246
  %v1340 = vpop.f32.mrb[0].mxu0
  %v1341 = vadd.f32 %v1257, %v1340
  %v1342 = vpop.f32.mrb[0].mxu0
  %v1343 = vpop.f32.mrb[0].mxu0
  %v1344 = vadd.f32 %v1257, %v1343
  %v1345 = vpop.f32.mrb[0].mxu0
  %1346 = vmatprep.mubr.bf16.mxu0 0
  %1347 = vmatmul.mubr.bf16.gmra.mrb[0].mxu0 %v1247
  %v1348 = vpop.f32.mrb[0].mxu0
  %v1349 = vadd.f32 %v1257, %v1348
  %v1350 = vpop.f32.mrb[0].mxu0
  %v1351 = vpop.f32.mrb[0].mxu0
  %v1352 = vadd.f32 %v1257, %v1351
  %v1353 = vpop.f32.mrb[0].mxu0
  %1354 = vmatprep.mubr.bf16.mxu0 0
  %1355 = vmatmul.mubr.bf16.gmra.mrb[0].mxu0 %v1248
  %v1356 = vpop.f32.mrb[0].mxu0
  %v1357 = vadd.f32 %v1257, %v1356
  %v1358 = vpop.f32.mrb[0].mxu0
  %v1359 = vpop.f32.mrb[0].mxu0
  %v1360 = vadd.f32 %v1257, %v1359
  %v1361 = vpop.f32.mrb[0].mxu0
  %1362 = vmatprep.mubr.bf16.mxu0 0
  %1363 = vmatmul.mubr.bf16.gmra.mrb[0].mxu0 %v1249
  %v1364 = vpop.f32.mrb[0].mxu0
  %v1365 = vadd.f32 %v1257, %v1364
  %v1366 = vpop.f32.mrb[0].mxu0
  %v1367 = vpop.f32.mrb[0].mxu0
  %v1368 = vadd.f32 %v1257, %v1367
  %v1369 = vpop.f32.mrb[0].mxu0
  %1370 = vmatprep.mubr.bf16.mxu0 0
  %1371 = vmatmul.mubr.bf16.gmra.mrb[0].mxu0 %v1250
  %v1372 = vpop.f32.mrb[0].mxu0
  %v1373 = vadd.f32 %v1257, %v1372
  %v1374 = vpop.f32.mrb[0].mxu0
  %v1375 = vpop.f32.mrb[0].mxu0
  %v1376 = vadd.f32 %v1257, %v1375
  %v1377 = vpop.f32.mrb[0].mxu0
  %1378 = vmatprep.mubr.bf16.mxu0 0
  %1379 = vmatmul.mubr.bf16.gmra.mrb[0].mxu0 %v1251
  %v1380 = vpop.f32.mrb[0].mxu0
  %v1381 = vadd.f32 %v1257, %v1380
  %v1382 = vpop.f32.mrb[0].mxu0
  %v1383 = vpop.f32.mrb[0].mxu0
  %v1384 = vadd.f32 %v1257, %v1383
  %v1385 = vpop.f32.mrb[0].mxu0
  %1386 = vmatprep.mubr.bf16.mxu0 0
  %1387 = vmatmul.mubr.bf16.gmra.mrb[0].mxu0 %v1252
  %v1388 = vpop.f32.mrb[0].mxu0
  %v1389 = vadd.f32 %v1257, %v1388
  %v1390 = vpop.f32.mrb[0].mxu0
  %v1391 = vpop.f32.mrb[0].mxu0
  %v1392 = vadd.f32 %v1257, %v1391
  %v1393 = vpop.f32.mrb[0].mxu0
  %1394 = vmatprep.mubr.bf16.mxu0 0
  %1395 = vmatmul.mubr.bf16.gmra.mrb[0].mxu0 %v1253
  %v1396 = vpop.f32.mrb[0].mxu0
  %v1397 = vadd.f32 %v1257, %v1396
  %v1398 = vpop.f32.mrb[0].mxu0
  %v1399 = vpop.f32.mrb[0].mxu0
  %v1400 = vadd.f32 %v1257, %v1399
  %v1401 = vpop.f32.mrb[0].mxu0
  %1402 = vdwg.mxu0
  %v1403 = vmax.f32 %v1341, 0.0
  %v1404 = vmax.f32 %v1344, 0.0
  %v1405 = vmax.f32 %v1349, 0.0
  %v1406 = vmax.f32 %v1352, 0.0
  %v1407 = vmax.f32 %v1357, 0.0
  %v1408 = vmax.f32 %v1360, 0.0
  %v1409 = vmax.f32 %v1365, 0.0
  %v1410 = vmax.f32 %v1368, 0.0
  %v1411 = vmax.f32 %v1373, 0.0
  %v1412 = vmax.f32 %v1376, 0.0
  %v1413 = vmax.f32 %v1381, 0.0
  %v1414 = vmax.f32 %v1384, 0.0
  %v1415 = vmax.f32 %v1389, 0.0
  %v1416 = vmax.f32 %v1392, 0.0
  %v1417 = vmax.f32 %v1397, 0.0
  %v1418 = vmax.f32 %v1400, 0.0
  %v1419 = vpack.c.bf16 %v1404, %v1403
  %v1420 = vpack.c.bf16 %v1406, %v1405
  %v1421 = vpack.c.bf16 %v1408, %v1407
  %v1422 = vpack.c.bf16 %v1410, %v1409
  %v1423 = vpack.c.bf16 %v1412, %v1411
  %v1424 = vpack.c.bf16 %v1414, %v1413
  %v1425 = vpack.c.bf16 %v1416, %v1415
  %v1426 = vpack.c.bf16 %v1418, %v1417
  %1427 = vmatprep.subr.bf16.mxu0 0
  %1428 = vmatpush1.bf16.msra.mxu0 %v1419
  %1429 = vmatprep.subr.bf16.mxu0 0
  %1430 = vmatpush1.bf16.msra.mxu0 %v1420
  %1431 = vmatprep.subr.bf16.mxu0 0
  %1432 = vmatpush1.bf16.msra.mxu0 %v1421
  %1433 = vmatprep.subr.bf16.mxu0 0
  %1434 = vmatpush1.bf16.msra.mxu0 %v1422
  %1435 = vmatprep.subr.bf16.mxu0 0
  %1436 = vmatpush1.bf16.msra.mxu0 %v1423
  %1437 = vmatprep.subr.bf16.mxu0 0
  %1438 = vmatpush1.bf16.msra.mxu0 %v1424
  %1439 = vmatprep.subr.bf16.mxu0 0
  %1440 = vmatpush1.bf16.msra.mxu0 %v1425
  %1441 = vmatprep.subr.bf16.mxu0 0
  %1442 = vmatpush1.bf16.msra.mxu0 %v1426
  %1443 = vmatprep.subr.bf16.mxu0 0
  %1444 = vmatpush1.bf16.msra.mxu0 0
  %1445 = vmatprep.subr.bf16.mxu0 0
  %1446 = vmatpush1.bf16.msra.mxu0 0
  %1447 = vmatprep.subr.bf16.mxu0 0
  %1448 = vmatpush1.bf16.msra.mxu0 0
  %1449 = vmatprep.subr.bf16.mxu0 0
  %1450 = vmatpush1.bf16.msra.mxu0 0
  %1451 = vmatprep.subr.bf16.mxu0 0
  %1452 = vmatpush1.bf16.msra.mxu0 0
  %1453 = vmatprep.subr.bf16.mxu0 0
  %1454 = vmatpush1.bf16.msra.mxu0 0
  %1455 = vmatprep.subr.bf16.mxu0 0
  %1456 = vmatpush1.bf16.msra.mxu0 0
  %1457 = vmatprep.subr.bf16.mxu0 0
  %1458 = vmatpush1.bf16.msra.mxu0 0
  %1459 = vmatprep.mubr.bf16.mxu0 0
  %1460 = vmatmul.mubr.bf16.gmra.mrb[0].mxu0 %v313
  %v1461 = vpop.f32.mrb[0].mxu0
  %v1462 = vadd.f32 0.0, %v1461
  %v1463 = vpop.f32.mrb[0].mxu0
  %v1464 = vpop.f32.mrb[0].mxu0
  %v1465 = vadd.f32 0.0, %v1464
  %v1466 = vpop.f32.mrb[0].mxu0
  %1467 = vmatprep.mubr.bf16.mxu0 0
  %1468 = vmatmul.mubr.bf16.gmra.mrb[0].mxu0 %v314
  %v1469 = vpop.f32.mrb[0].mxu0
  %v1470 = vadd.f32 0.0, %v1469
  %v1471 = vpop.f32.mrb[0].mxu0
  %v1472 = vpop.f32.mrb[0].mxu0
  %v1473 = vadd.f32 0.0, %v1472
  %v1474 = vpop.f32.mrb[0].mxu0
  %1475 = vmatprep.mubr.bf16.mxu0 0
  %1476 = vmatmul.mubr.bf16.gmra.mrb[0].mxu0 %v315
  %v1477 = vpop.f32.mrb[0].mxu0
  %v1478 = vadd.f32 0.0, %v1477
  %v1479 = vpop.f32.mrb[0].mxu0
  %v1480 = vpop.f32.mrb[0].mxu0
  %v1481 = vadd.f32 0.0, %v1480
  %v1482 = vpop.f32.mrb[0].mxu0
  %1483 = vmatprep.mubr.bf16.mxu0 0
  %1484 = vmatmul.mubr.bf16.gmra.mrb[0].mxu0 %v316
  %v1485 = vpop.f32.mrb[0].mxu0
  %v1486 = vadd.f32 0.0, %v1485
  %v1487 = vpop.f32.mrb[0].mxu0
  %v1488 = vpop.f32.mrb[0].mxu0
  %v1489 = vadd.f32 0.0, %v1488
  %v1490 = vpop.f32.mrb[0].mxu0
  %1491 = vmatprep.mubr.bf16.mxu0 0
  %1492 = vmatmul.mubr.bf16.gmra.mrb[0].mxu0 %v317
  %v1493 = vpop.f32.mrb[0].mxu0
  %v1494 = vadd.f32 0.0, %v1493
  %v1495 = vpop.f32.mrb[0].mxu0
  %v1496 = vpop.f32.mrb[0].mxu0
  %v1497 = vadd.f32 0.0, %v1496
  %v1498 = vpop.f32.mrb[0].mxu0
  %1499 = vmatprep.mubr.bf16.mxu0 0
  %1500 = vmatmul.mubr.bf16.gmra.mrb[0].mxu0 %v318
  %v1501 = vpop.f32.mrb[0].mxu0
  %v1502 = vadd.f32 0.0, %v1501
  %v1503 = vpop.f32.mrb[0].mxu0
  %v1504 = vpop.f32.mrb[0].mxu0
  %v1505 = vadd.f32 0.0, %v1504
  %v1506 = vpop.f32.mrb[0].mxu0
  %1507 = vmatprep.mubr.bf16.mxu0 0
  %1508 = vmatmul.mubr.bf16.gmra.mrb[0].mxu0 %v319
  %v1509 = vpop.f32.mrb[0].mxu0
  %v1510 = vadd.f32 0.0, %v1509
  %v1511 = vpop.f32.mrb[0].mxu0
  %v1512 = vpop.f32.mrb[0].mxu0
  %v1513 = vadd.f32 0.0, %v1512
  %v1514 = vpop.f32.mrb[0].mxu0
  %1515 = vmatprep.mubr.bf16.mxu0 0
  %1516 = vmatmul.mubr.bf16.gmra.mrb[0].mxu0 %v320
  %v1517 = vpop.f32.mrb[0].mxu0
  %v1518 = vadd.f32 0.0, %v1517
  %v1519 = vpop.f32.mrb[0].mxu0
  %v1520 = vpop.f32.mrb[0].mxu0
  %v1521 = vadd.f32 0.0, %v1520
  %v1522 = vpop.f32.mrb[0].mxu0
  %1523 = vdwg.mxu0
  %v1524 = vpack.c.bf16 %v1465, %v1462
  %v1525 = vpack.c.bf16 %v1473, %v1470
  %v1526 = vpack.c.bf16 %v1481, %v1478
  %v1527 = vpack.c.bf16 %v1489, %v1486
  %v1528 = vpack.c.bf16 %v1497, %v1494
  %v1529 = vpack.c.bf16 %v1505, %v1502
  %v1530 = vpack.c.bf16 %v1513, %v1510
  %v1531 = vpack.c.bf16 %v1521, %v1518
  %v1532 = vlaneseq
  %v1533 = vshrl.u32 %v1532, 7
  %v1534 = vsub.s32 0, %v1533
  %v1535 = vrot.slane %v1245, %v1534
  %v1568 = vunpack.c.l.b16 %v1212
  %v1569 = vunpack.c.l.b16 %v1213
  %v1570 = vunpack.c.l.b16 %v1214
  %v1571 = vunpack.c.l.b16 %v1215
  %v1572 = vunpack.c.l.b16 %v1216
  %v1573 = vunpack.c.l.b16 %v1217
  %v1574 = vunpack.c.l.b16 %v1218
  %v1575 = vunpack.c.l.b16 %v1219
  %v1576 = vunpack.c.l.b16 %v1220
  %v1577 = vunpack.c.l.b16 %v1221
  %v1578 = vunpack.c.l.b16 %v1222
  %v1579 = vunpack.c.l.b16 %v1223
  %v1580 = vunpack.c.l.b16 %v1224
  %v1581 = vunpack.c.l.b16 %v1225
  %v1582 = vunpack.c.l.b16 %v1226
  %v1583 = vunpack.c.l.b16 %v1227
  %v1584 = vunpack.c.l.b16 %v1228
  %v1585 = vunpack.c.l.b16 %v1229
  %v1586 = vunpack.c.l.b16 %v1230
  %v1587 = vunpack.c.l.b16 %v1231
  %v1588 = vunpack.c.l.b16 %v1232
  %v1589 = vunpack.c.l.b16 %v1233
  %v1590 = vunpack.c.l.b16 %v1234
  %v1591 = vunpack.c.l.b16 %v1235
  %v1592 = vunpack.c.l.b16 %v1236
  %v1593 = vunpack.c.l.b16 %v1237
  %v1594 = vunpack.c.l.b16 %v1238
  %v1595 = vunpack.c.l.b16 %v1239
  %v1596 = vunpack.c.l.b16 %v1240
  %v1597 = vunpack.c.l.b16 %v1241
  %v1598 = vunpack.c.l.b16 %v1242
  %v1599 = vunpack.c.l.b16 %v1243
  %v1600 = vpack.c.b16 %v1569, %v1568
  %v1601 = vpack.c.b16 %v1571, %v1570
  %v1602 = vpack.c.b16 %v1573, %v1572
  %v1603 = vpack.c.b16 %v1575, %v1574
  %v1604 = vpack.c.b16 %v1577, %v1576
  %v1605 = vpack.c.b16 %v1579, %v1578
  %v1606 = vpack.c.b16 %v1581, %v1580
  %v1607 = vpack.c.b16 %v1583, %v1582
  %v1608 = vpack.c.b16 %v1585, %v1584
  %v1609 = vpack.c.b16 %v1587, %v1586
  %v1610 = vpack.c.b16 %v1589, %v1588
  %v1611 = vpack.c.b16 %v1591, %v1590
  %v1612 = vpack.c.b16 %v1593, %v1592
  %v1613 = vpack.c.b16 %v1595, %v1594
  %v1614 = vpack.c.b16 %v1597, %v1596
  %v1615 = vpack.c.b16 %v1599, %v1598
  %1632 = vmatprep.subr.bf16.mxu0 0
  %1633 = vmatpush1.bf16.msra.mxu0 %v1600
  %1634 = vmatprep.subr.bf16.mxu0 0
  %1635 = vmatpush1.bf16.msra.mxu0 %v1601
  %1636 = vmatprep.subr.bf16.mxu0 0
  %1637 = vmatpush1.bf16.msra.mxu0 %v1602
  %1638 = vmatprep.subr.bf16.mxu0 0
  %1639 = vmatpush1.bf16.msra.mxu0 %v1603
  %1640 = vmatprep.subr.bf16.mxu0 0
  %1641 = vmatpush1.bf16.msra.mxu0 %v1604
  %1642 = vmatprep.subr.bf16.mxu0 0
  %1643 = vmatpush1.bf16.msra.mxu0 %v1605
  %1644 = vmatprep.subr.bf16.mxu0 0
  %1645 = vmatpush1.bf16.msra.mxu0 %v1606
  %1646 = vmatprep.subr.bf16.mxu0 0
  %1647 = vmatpush1.bf16.msra.mxu0 %v1607
  %1648 = vmatprep.subr.bf16.mxu0 0
  %1649 = vmatpush1.bf16.msra.mxu0 %v1608
  %1650 = vmatprep.subr.bf16.mxu0 0
  %1651 = vmatpush1.bf16.msra.mxu0 %v1609
  %1652 = vmatprep.subr.bf16.mxu0 0
  %1653 = vmatpush1.bf16.msra.mxu0 %v1610
  %1654 = vmatprep.subr.bf16.mxu0 0
  %1655 = vmatpush1.bf16.msra.mxu0 %v1611
  %1656 = vmatprep.subr.bf16.mxu0 0
  %1657 = vmatpush1.bf16.msra.mxu0 %v1612
  %1658 = vmatprep.subr.bf16.mxu0 0
  %1659 = vmatpush1.bf16.msra.mxu0 %v1613
  %1660 = vmatprep.subr.bf16.mxu0 0
  %1661 = vmatpush1.bf16.msra.mxu0 %v1614
  %1662 = vmatprep.subr.bf16.mxu0 0
  %1663 = vmatpush1.bf16.msra.mxu0 %v1615
  %1664 = vmatprep.mubr.bf16.mxu0 %v1246
  %1665 = vmatmul.mubr.bf16.gmra.mrb[0].mxu0 %v1524
  %v1666 = vpop.f32.mrb[0].mxu0
  %v1667 = vadd.f32 %v1535, %v1666
  %v1668 = vpop.f32.mrb[0].mxu0
  %v1669 = vpop.f32.mrb[0].mxu0
  %v1670 = vadd.f32 %v1535, %v1669
  %v1671 = vpop.f32.mrb[0].mxu0
  %1672 = vmatprep.mubr.bf16.mxu0 %v1247
  %1673 = vmatmul.mubr.bf16.gmra.mrb[0].mxu0 %v1525
  %v1674 = vpop.f32.mrb[0].mxu0
  %v1675 = vadd.f32 %v1535, %v1674
  %v1676 = vpop.f32.mrb[0].mxu0
  %v1677 = vpop.f32.mrb[0].mxu0
  %v1678 = vadd.f32 %v1535, %v1677
  %v1679 = vpop.f32.mrb[0].mxu0
  %1680 = vmatprep.mubr.bf16.mxu0 %v1248
  %1681 = vmatmul.mubr.bf16.gmra.mrb[0].mxu0 %v1526
  %v1682 = vpop.f32.mrb[0].mxu0
  %v1683 = vadd.f32 %v1535, %v1682
  %v1684 = vpop.f32.mrb[0].mxu0
  %v1685 = vpop.f32.mrb[0].mxu0
  %v1686 = vadd.f32 %v1535, %v1685
  %v1687 = vpop.f32.mrb[0].mxu0
  %1688 = vmatprep.mubr.bf16.mxu0 %v1249
  %1689 = vmatmul.mubr.bf16.gmra.mrb[0].mxu0 %v1527
  %v1690 = vpop.f32.mrb[0].mxu0
  %v1691 = vadd.f32 %v1535, %v1690
  %v1692 = vpop.f32.mrb[0].mxu0
  %v1693 = vpop.f32.mrb[0].mxu0
  %v1694 = vadd.f32 %v1535, %v1693
  %v1695 = vpop.f32.mrb[0].mxu0
  %1696 = vmatprep.mubr.bf16.mxu0 %v1250
  %1697 = vmatmul.mubr.bf16.gmra.mrb[0].mxu0 %v1528
  %v1698 = vpop.f32.mrb[0].mxu0
  %v1699 = vadd.f32 %v1535, %v1698
  %v1700 = vpop.f32.mrb[0].mxu0
  %v1701 = vpop.f32.mrb[0].mxu0
  %v1702 = vadd.f32 %v1535, %v1701
  %v1703 = vpop.f32.mrb[0].mxu0
  %1704 = vmatprep.mubr.bf16.mxu0 %v1251
  %1705 = vmatmul.mubr.bf16.gmra.mrb[0].mxu0 %v1529
  %v1706 = vpop.f32.mrb[0].mxu0
  %v1707 = vadd.f32 %v1535, %v1706
  %v1708 = vpop.f32.mrb[0].mxu0
  %v1709 = vpop.f32.mrb[0].mxu0
  %v1710 = vadd.f32 %v1535, %v1709
  %v1711 = vpop.f32.mrb[0].mxu0
  %1712 = vmatprep.mubr.bf16.mxu0 %v1252
  %1713 = vmatmul.mubr.bf16.gmra.mrb[0].mxu0 %v1530
  %v1714 = vpop.f32.mrb[0].mxu0
  %v1715 = vadd.f32 %v1535, %v1714
  %v1716 = vpop.f32.mrb[0].mxu0
  %v1717 = vpop.f32.mrb[0].mxu0
  %v1718 = vadd.f32 %v1535, %v1717
  %v1719 = vpop.f32.mrb[0].mxu0
  %1720 = vmatprep.mubr.bf16.mxu0 %v1253
  %1721 = vmatmul.mubr.bf16.gmra.mrb[0].mxu0 %v1531
  %v1722 = vpop.f32.mrb[0].mxu0
  %v1723 = vadd.f32 %v1535, %v1722
  %v1724 = vpop.f32.mrb[0].mxu0
  %v1725 = vpop.f32.mrb[0].mxu0
  %v1726 = vadd.f32 %v1535, %v1725
  %v1727 = vpop.f32.mrb[0].mxu0
  %1728 = vdwg.mxu0
  %v1729 = vxor.u32 %v1667, 2147483648
  %v1730 = vxor.u32 %v1670, 2147483648
  %v1731 = vxor.u32 %v1675, 2147483648
  %v1732 = vxor.u32 %v1678, 2147483648
  %v1733 = vxor.u32 %v1683, 2147483648
  %v1734 = vxor.u32 %v1686, 2147483648
  %v1735 = vxor.u32 %v1691, 2147483648
  %v1736 = vxor.u32 %v1694, 2147483648
  %v1737 = vxor.u32 %v1699, 2147483648
  %v1738 = vxor.u32 %v1702, 2147483648
  %v1739 = vxor.u32 %v1707, 2147483648
  %v1740 = vxor.u32 %v1710, 2147483648
  %v1741 = vxor.u32 %v1715, 2147483648
  %v1742 = vxor.u32 %v1718, 2147483648
  %v1743 = vxor.u32 %v1723, 2147483648
  %v1744 = vxor.u32 %v1726, 2147483648
  %v1745 = vmul.f32 %v1729, 1.442695
  %v1746 = vpow.pop %v1745
  %v1747 = vmul.f32 %v1730, 1.442695
  %v1748 = vpow.pop %v1747
  %v1749 = vmul.f32 %v1731, 1.442695
  %v1750 = vpow.pop %v1749
  %v1751 = vmul.f32 %v1732, 1.442695
  %v1752 = vpow.pop %v1751
  %v1753 = vmul.f32 %v1733, 1.442695
  %v1754 = vpow.pop %v1753
  %v1755 = vmul.f32 %v1734, 1.442695
  %v1756 = vpow.pop %v1755
  %v1757 = vmul.f32 %v1735, 1.442695
  %v1758 = vpow.pop %v1757
  %v1759 = vmul.f32 %v1736, 1.442695
  %v1760 = vpow.pop %v1759
  %v1761 = vmul.f32 %v1737, 1.442695
  %v1762 = vpow.pop %v1761
  %v1763 = vmul.f32 %v1738, 1.442695
  %v1764 = vpow.pop %v1763
  %v1765 = vmul.f32 %v1739, 1.442695
  %v1766 = vpow.pop %v1765
  %v1767 = vmul.f32 %v1740, 1.442695
  %v1768 = vpow.pop %v1767
  %v1769 = vmul.f32 %v1741, 1.442695
  %v1770 = vpow.pop %v1769
  %v1771 = vmul.f32 %v1742, 1.442695
  %v1772 = vpow.pop %v1771
  %v1773 = vmul.f32 %v1743, 1.442695
  %v1774 = vpow.pop %v1773
  %v1775 = vmul.f32 %v1744, 1.442695
  %v1776 = vpow.pop %v1775
  %v1777 = vadd.f32 %v1746, 1.0
  %v1778 = vadd.f32 %v1748, 1.0
  %v1779 = vadd.f32 %v1750, 1.0
  %v1780 = vadd.f32 %v1752, 1.0
  %v1781 = vadd.f32 %v1754, 1.0
  %v1782 = vadd.f32 %v1756, 1.0
  %v1783 = vadd.f32 %v1758, 1.0
  %v1784 = vadd.f32 %v1760, 1.0
  %v1785 = vadd.f32 %v1762, 1.0
  %v1786 = vadd.f32 %v1764, 1.0
  %v1787 = vadd.f32 %v1766, 1.0
  %v1788 = vadd.f32 %v1768, 1.0
  %v1789 = vadd.f32 %v1770, 1.0
  %v1790 = vadd.f32 %v1772, 1.0
  %v1791 = vadd.f32 %v1774, 1.0
  %v1792 = vadd.f32 %v1776, 1.0
  %v1793 = vrcp.pop %v1777
  %v1794 = vmul.f32 1.0, %v1793
  %v1795 = vrcp.pop %v1778
  %v1796 = vmul.f32 1.0, %v1795
  %v1797 = vrcp.pop %v1779
  %v1798 = vmul.f32 1.0, %v1797
  %v1799 = vrcp.pop %v1780
  %v1800 = vmul.f32 1.0, %v1799
  %v1801 = vrcp.pop %v1781
  %v1802 = vmul.f32 1.0, %v1801
  %v1803 = vrcp.pop %v1782
  %v1804 = vmul.f32 1.0, %v1803
  %v1805 = vrcp.pop %v1783
  %v1806 = vmul.f32 1.0, %v1805
  %v1807 = vrcp.pop %v1784
  %v1808 = vmul.f32 1.0, %v1807
  %v1809 = vrcp.pop %v1785
  %v1810 = vmul.f32 1.0, %v1809
  %v1811 = vrcp.pop %v1786
  %v1812 = vmul.f32 1.0, %v1811
  %v1813 = vrcp.pop %v1787
  %v1814 = vmul.f32 1.0, %v1813
  %v1815 = vrcp.pop %v1788
  %v1816 = vmul.f32 1.0, %v1815
  %v1817 = vrcp.pop %v1789
  %v1818 = vmul.f32 1.0, %v1817
  %v1819 = vrcp.pop %v1790
  %v1820 = vmul.f32 1.0, %v1819
  %v1821 = vrcp.pop %v1791
  %v1822 = vmul.f32 1.0, %v1821
  %v1823 = vrcp.pop %v1792
  %v1824 = vmul.f32 1.0, %v1823
  %v1825 = vpack.c.bf16 %v1796, %v1794
  %v1826 = vpack.c.bf16 %v1800, %v1798
  %v1827 = vpack.c.bf16 %v1804, %v1802
  %v1828 = vpack.c.bf16 %v1808, %v1806
  %v1829 = vpack.c.bf16 %v1812, %v1810
  %v1830 = vpack.c.bf16 %v1816, %v1814
  %v1831 = vpack.c.bf16 %v1820, %v1818
  %v1832 = vpack.c.bf16 %v1824, %v1822
  %v1841 = vunpack.c.l.b16 %v1825
  %v1842 = vunpack.c.h.b16 %v1825
  %v1843 = vunpack.c.l.b16 %v1826
  %v1844 = vunpack.c.h.b16 %v1826
  %v1845 = vunpack.c.l.b16 %v1827
  %v1846 = vunpack.c.h.b16 %v1827
  %v1847 = vunpack.c.l.b16 %v1828
  %v1848 = vunpack.c.h.b16 %v1828
  %v1849 = vunpack.c.l.b16 %v1829
  %v1850 = vunpack.c.h.b16 %v1829
  %v1851 = vunpack.c.l.b16 %v1830
  %v1852 = vunpack.c.h.b16 %v1830
  %v1853 = vunpack.c.l.b16 %v1831
  %v1854 = vunpack.c.h.b16 %v1831
  %v1855 = vunpack.c.l.b16 %v1832
  %v1856 = vunpack.c.h.b16 %v1832
  %v1857 = vpack.c.b16 %v1841, %v1841
  %v1858 = vpack.c.b16 %v1842, %v1842
  %v1859 = vpack.c.b16 %v1843, %v1843
  %v1860 = vpack.c.b16 %v1844, %v1844
  %v1861 = vpack.c.b16 %v1845, %v1845
  %v1862 = vpack.c.b16 %v1846, %v1846
  %v1863 = vpack.c.b16 %v1847, %v1847
  %v1864 = vpack.c.b16 %v1848, %v1848
  %v1865 = vpack.c.b16 %v1849, %v1849
  %v1866 = vpack.c.b16 %v1850, %v1850
  %v1867 = vpack.c.b16 %v1851, %v1851
  %v1868 = vpack.c.b16 %v1852, %v1852
  %v1869 = vpack.c.b16 %v1853, %v1853
  %v1870 = vpack.c.b16 %v1854, %v1854
  %v1871 = vpack.c.b16 %v1855, %v1855
  %v1872 = vpack.c.b16 %v1856, %v1856
  %1889 = vst [vmem:[%s4] sm:$0xf] %v1857
  %1890 = vst [vmem:[%s4 + $0x4] sm:$0xf] %v1858
  %1891 = vst [vmem:[%s4 + $0x8] sm:$0xf] %v1859
  %1892 = vst [vmem:[%s4 + $0xc] sm:$0xf] %v1860
  %1893 = vst [vmem:[%s4 + $0x10] sm:$0xf] %v1861
  %1894 = vst [vmem:[%s4 + $0x14] sm:$0xf] %v1862
  %1895 = vst [vmem:[%s4 + $0x18] sm:$0xf] %v1863
  %1896 = vst [vmem:[%s4 + $0x1c] sm:$0xf] %v1864
  %1897 = vst [vmem:[%s4 + $0x20] sm:$0xf] %v1865
  %1898 = vst [vmem:[%s4 + $0x24] sm:$0xf] %v1866
  %1899 = vst [vmem:[%s4 + $0x28] sm:$0xf] %v1867
  %1900 = vst [vmem:[%s4 + $0x2c] sm:$0xf] %v1868
  %1901 = vst [vmem:[%s4 + $0x30] sm:$0xf] %v1869
  %1902 = vst [vmem:[%s4 + $0x34] sm:$0xf] %v1870
  %1903 = vst [vmem:[%s4 + $0x38] sm:$0xf] %v1871
  %1904 = vst [vmem:[%s4 + $0x3c] sm:$0xf] %v1872
  // Predicated region
  $region18: #{my_model.1} parent=0 // pred_check
    _
  $region19: #{my_model.1} parent=0 // pred_check_branch
    %1906 = sbr.rel (0) target = $region21
  $region20: #{my_model.1} parent=0 // pred_region
    _
  $region21: #{my_model.1} parent=0 // pred_fallthru
    _
  // Predicated region
  $region22: #{my_model.1} parent=0 // pred_check
    _
  $region23: #{my_model.1} parent=0 // pred_check_branch
    %1908 = sbr.rel (0) target = $region25
  $region24: #{my_model.1} parent=0 // pred_region
    _
  $region25: #{my_model.1} parent=0 // pred_fallthru
    _

</llo_original>
